<compile_context>
chip_gen: v6e
topology: v6e:2x2x1
jax: 0.10.0
libtpu: 0.0.40
codegen_flags: <defaults>
</compile_context>

<pallas_src>
import jax
import jax.numpy as jnp
from jax.experimental import pallas as pl
from jax.experimental.pallas import tpu as pltpu

EPS = 1e-5


# ----------------------------------------------------------------------------
# Fused kernel
# ----------------------------------------------------------------------------
def _make_fused_kernel(L2, padL, n_valid, inv_n):
    def shift_down(x, s):
        # Causal shift inside one batch item: rows [0, s) become zeros (= causal pad).
        # Each grid step holds exactly one batch item, so no cross-batch masking needed.
        return jnp.concatenate(
            [jnp.zeros((s, x.shape[1]), jnp.float32), x[:L2 - s, :]], axis=0)

    def causal_conv3(parts, w_refs, b_ref):
        # y[t] = b + sum_parts sum_k  part[t-2+k] @ W_part[k]
        acc = b_ref[...]
        for x, w_ref in zip(parts, w_refs):
            acc = acc + jnp.dot(shift_down(x, 2), w_ref[0],
                                preferred_element_type=jnp.float32)
            acc = acc + jnp.dot(shift_down(x, 1), w_ref[1],
                                preferred_element_type=jnp.float32)
            acc = acc + jnp.dot(x, w_ref[2],
                                preferred_element_type=jnp.float32)
        return acc

    def kernel(x1e_ref, x2_ref, wt0_ref, wt1_ref, bt_ref,
               w1a_ref, w1b_ref, b1_ref, g1_ref, be1_ref,
               w2_ref, b2_ref, g2_ref, be2_ref,
               out_ref, s1_ref, s2_ref):
        p = pl.program_id(0)   # phase
        b = pl.program_id(1)   # batch item

        @pl.when(jnp.logical_and(p == 0, b == 0))
        def _init():
            s1_ref[...] = jnp.zeros_like(s1_ref)
            s2_ref[...] = jnp.zeros_like(s2_ref)

        # Row masks for the fused ConvTranspose1d (hoisted, computed once per step).
        row = jax.lax.broadcasted_iota(jnp.int32, (L2, 1), 0)
        valid = jnp.logical_and(row >= padL, row < padL + n_valid)
        even = ((row - padL) % 2) == 0

        x1e = x1e_ref[0].astype(jnp.float32)     # (L2, Cin)  frame-repeated + padded x1
        x2t = x2_ref[0].astype(jnp.float32)      # (L2, Chalf)

        # --- ConvTranspose1d(k=2, stride=2) fused: even/odd output rows select between
        #     the two taps; the bias only lands on rows produced by a real input frame.
        #     The upsampled signal lives only in VMEM.
        u = jnp.where(even,
                      jnp.dot(x1e, wt0_ref[...], preferred_element_type=jnp.float32),
                      jnp.dot(x1e, wt1_ref[...], preferred_element_type=jnp.float32))
        u = u + jnp.where(valid, bt_ref[...], 0.0)

        # --- conv1 over the (implicit) channel concat [u | x2]: the weight is split
        #     into its u-rows and x2-rows instead of materializing the concat.
        y1 = causal_conv3((u, x2t), (w1a_ref, w1b_ref), b1_ref)   # (L2, out_ch)

        @pl.when(p == 0)
        def _stats1():
            s1_ref[0:1, :] += jnp.sum(y1, axis=0, keepdims=True)
            s1_ref[1:2, :] += jnp.sum(y1 * y1, axis=0, keepdims=True)

        @pl.when(p >= 1)
        def _rest():
            # Global (whole-batch) BatchNorm1d training statistics, biased variance.
            mu1 = s1_ref[0:1, :] * inv_n
            var1 = s1_ref[1:2, :] * inv_n - mu1 * mu1
            sc1 = g1_ref[...] * jax.lax.rsqrt(var1 + EPS)
            h1 = jnp.maximum(y1 * sc1 + (be1_ref[...] - mu1 * sc1), 0.0)

            y2 = causal_conv3((h1,), (w2_ref,), b2_ref)           # (L2, out_ch)

            @pl.when(p == 1)
            def _stats2():
                s2_ref[0:1, :] += jnp.sum(y2, axis=0, keepdims=True)
                s2_ref[1:2, :] += jnp.sum(y2 * y2, axis=0, keepdims=True)

            @pl.when(p == 2)
            def _emit():
                mu2 = s2_ref[0:1, :] * inv_n
                var2 = s2_ref[1:2, :] * inv_n - mu2 * mu2
                sc2 = g2_ref[...] * jax.lax.rsqrt(var2 + EPS)
                out_ref[0] = jnp.maximum(
                    y2 * sc2 + (be2_ref[...] - mu2 * sc2), 0.0).astype(out_ref.dtype)

    return kernel


# ----------------------------------------------------------------------------
# Wrapper: PyTorch-style NCL in / NCL out.  params hold PyTorch-layout weights.
# ----------------------------------------------------------------------------
def up_causal2_pallas(x1, x2, params):
    B, Cin, L1 = x1.shape
    _, Chalf, L2 = x2.shape
    out_ch = params["W1"].shape[0]
    Ccat = Cin + Chalf
    diffX = L2 - 2 * L1
    assert diffX >= 0, "x2 must be at least as long as the upsampled x1"
    padL, padR = diffX // 2, diffX - diffX // 2

    # ---- parameter re-layout (one-time glue on tiny tensors) ----
    Wt0 = params["Wt"][:, :, 0]                              # (Cin, Cin)
    Wt1 = params["Wt"][:, :, 1]                              # (Cin, Cin)
    bt = params["bt"].reshape(1, Cin)
    W1_k = jnp.transpose(params["W1"], (2, 1, 0))            # (3, Ccat, out_ch)
    W1a = W1_k[:, :Cin, :]                                   # (3, Cin,  out_ch) up rows
    W1b = W1_k[:, Cin:, :]                                   # (3, Chalf, out_ch) skip rows
    W2k = jnp.transpose(params["W2"], (2, 1, 0))             # (3, out_ch, out_ch)
    b1 = params["b1"].reshape(1, out_ch)
    b2 = params["b2"].reshape(1, out_ch)
    g1 = params["g1"].reshape(1, out_ch)
    g2 = params["g2"].reshape(1, out_ch)
    be1 = params["be1"].reshape(1, out_ch)
    be2 = params["be2"].reshape(1, out_ch)

    # ---- input re-layout: time on sublanes, channels on lanes ----
    # x1 frames are repeated twice and zero-padded by diffX so the kernel can apply the
    # two transposed-conv taps with an even/odd row select; the ConvTranspose output
    # itself never touches HBM.
    x1_blc = jnp.transpose(x1, (0, 2, 1))                    # (B, L1, Cin)
    x1e = jnp.pad(jnp.repeat(x1_blc, 2, axis=1),
                  ((0, 0), (padL, padR), (0, 0)))            # (B, L2, Cin)
    x2_blc = jnp.transpose(x2, (0, 2, 1))                    # (B, L2, Chalf)

    kernel = _make_fused_kernel(L2, padL, 2 * L1, 1.0 / float(B * L2))

    per_b = lambda i, j: (j, 0, 0)        # one batch item per grid step
    const2 = lambda i, j: (0, 0)          # resident small params
    const3 = lambda i, j: (0, 0, 0)

    grid_spec = pltpu.PrefetchScalarGridSpec(
        num_scalar_prefetch=0,
        grid=(3, B),                       # (phase, batch); batch is the inner loop
        in_specs=[
            pl.BlockSpec((1, L2, Cin), per_b),
            pl.BlockSpec((1, L2, Chalf), per_b),
            pl.BlockSpec((Cin, Cin), const2),
            pl.BlockSpec((Cin, Cin), const2),
            pl.BlockSpec((1, Cin), const2),
            pl.BlockSpec((3, Cin, out_ch), const3),
            pl.BlockSpec((3, Chalf, out_ch), const3),
            pl.BlockSpec((1, out_ch), const2),
            pl.BlockSpec((1, out_ch), const2),
            pl.BlockSpec((1, out_ch), const2),
            pl.BlockSpec((3, out_ch, out_ch), const3),
            pl.BlockSpec((1, out_ch), const2),
            pl.BlockSpec((1, out_ch), const2),
            pl.BlockSpec((1, out_ch), const2),
        ],
        # Only phase 2 produces real output tiles; phases 0/1 park on block 0 so the
        # output is written back exactly once per batch item (1x output traffic).
        out_specs=pl.BlockSpec((1, L2, out_ch),
                               lambda i, j: (jnp.where(i == 2, j, 0), 0, 0)),
        scratch_shapes=[pltpu.VMEM((2, out_ch), jnp.float32),   # [sum; sum^2] of y1
                        pltpu.VMEM((2, out_ch), jnp.float32)],  # [sum; sum^2] of y2
    )

    # Advisory cost + explicit VMEM budget (streamed blocks are per-batch-item slabs).
    flops_per_row = 2 * (2 * Cin * Cin + 3 * Ccat * out_ch + 3 * out_ch * out_ch)
    cost = pl.CostEstimate(
        flops=int(3 * B * L2 * flops_per_row),
        transcendentals=int(4 * B * out_ch),
        bytes_accessed=int(4 * B * L2 * (3 * (Cin + Chalf) + out_ch)),
    )
    step_bytes = 4 * L2 * (Cin + Chalf + out_ch)
    vmem_limit = int(min(100 * 1024 * 1024,
                         max(16 * 1024 * 1024, 8 * step_bytes + (2 << 20))))

    out = pl.pallas_call(
        kernel,
        grid_spec=grid_spec,
        out_shape=jax.ShapeDtypeStruct((B, L2, out_ch), jnp.float32),
        compiler_params=pltpu.CompilerParams(
            # Phase axis must complete before the next phase starts (global BN stats),
            # and the batch axis shares the stats scratch accumulator -> both
            # sequential.  (Per-core partial stats would be needed to mark the batch
            # axis "parallel" for v7x megacore.)
            dimension_semantics=("arbitrary", "arbitrary"),
            vmem_limit_bytes=vmem_limit,
        ),
        cost_estimate=cost,
    )(x1e, x2_blc, Wt0, Wt1, bt, W1a, W1b, b1, g1, be1, W2k, b2, g2, be2)

    return jnp.transpose(out, (0, 2, 1))                     # (B, out_ch, L2)


# ----------------------------------------------------------------------------
# Pure-JAX reference (independent of the kernel math) for validation.
# ----------------------------------------------------------------------------
def ref_forward(x1, x2, params):
    B, Cin, L1 = x1.shape
    Wt, bt = params["Wt"], params["bt"]
    # ConvTranspose1d(k=2, stride=2): out[b, o, 2t+k] = sum_c x[b,c,t] Wt[c,o,k] + bt
    u = jnp.einsum("bct,cok->botk", x1, Wt).reshape(B, Cin, 2 * L1) + bt[None, :, None]
    diffX = x2.shape[2] - u.shape[2]
    u = jnp.pad(u, ((0, 0), (0, 0), (diffX // 2, diffX - diffX // 2)))
    xc = jnp.concatenate([u, x2], axis=1)

    def block(x, W, b, g, be):
        xp = jnp.pad(x, ((0, 0), (0, 0), (2, 0)))
        y = jax.lax.conv_general_dilated(
            xp, W, window_strides=(1,), padding="VALID",
            dimension_numbers=("NCH", "OIH", "NCH"))
        y = y + b[None, :, None]
        mu = jnp.mean(y, axis=(0, 2), keepdims=True)
        var = jnp.mean((y - mu) ** 2, axis=(0, 2), keepdims=True)
        y = g[None, :, None] * (y - mu) * jax.lax.rsqrt(var + EPS) + be[None, :, None]
        return jnp.maximum(y, 0.0)

    y = block(xc, params["W1"], params["b1"], params["g1"], params["be1"])
    y = block(y, params["W2"], params["b2"], params["g2"], params["be2"])
    return y


if __name__ == "__main__":
    key = jax.random.PRNGKey(0)

    def make_case(k, B, in_ch, out_ch, L1, L2):
        Chalf = in_ch // 2
        Ccat = 3 * in_ch // 2
        ks = jax.random.split(k, 8)
        x1 = jax.random.normal(ks[0], (B, in_ch, L1), jnp.float32)
        x2 = jax.random.normal(ks[1], (B, Chalf, L2), jnp.float32)
        params = dict(
            # ConvTranspose1d(in_ch, in_ch, 2, stride=2): weight (in_ch, in_ch, 2)
            Wt=0.2 * jax.random.normal(ks[2], (in_ch, in_ch, 2), jnp.float32),
            bt=0.1 * jax.random.normal(ks[3], (in_ch,), jnp.float32),
            # Conv1d(3*in_ch//2, out_ch, 3): weight (out_ch, Ccat, 3)
            W1=0.2 * jax.random.normal(ks[4], (out_ch, Ccat, 3), jnp.float32),
            b1=0.1 * jax.random.normal(ks[5], (out_ch,), jnp.float32),
            # Conv1d(out_ch, out_ch, 3)
            W2=0.2 * jax.random.normal(ks[6], (out_ch, out_ch, 3), jnp.float32),
            b2=0.1 * jax.random.normal(ks[7], (out_ch,), jnp.float32),
            # BatchNorm1d default init (training mode -> batch statistics)
            g1=jnp.ones((out_ch,), jnp.float32), be1=jnp.zeros((out_ch,), jnp.float32),
            g2=jnp.ones((out_ch,), jnp.float32), be2=jnp.zeros((out_ch,), jnp.float32),
        )
        return x1, x2, params

    fn = jax.jit(up_causal2_pallas)
    k1, k2 = jax.random.split(key)

    # case 1: diffX == 0 (L2 = 2*L1)
    x1, x2, params = make_case(k1, B=2, in_ch=4, out_ch=8, L1=8, L2=16)
    out = jax.block_until_ready(fn(x1, x2, params))
    ref = jax.block_until_ready(ref_forward(x1, x2, params))
    assert out.shape == ref.shape == (2, 8, 16), out.shape
    err = float(jnp.max(jnp.abs(out - ref)))
    assert err < 1e-4, err

    # case 2: diffX == 2 (asymmetric pad path of the original module)
    x1, x2, params = make_case(k2, B=2, in_ch=4, out_ch=8, L1=7, L2=16)
    out = jax.block_until_ready(fn(x1, x2, params))
    ref = jax.block_until_ready(ref_forward(x1, x2, params))
    err = float(jnp.max(jnp.abs(out - ref)))
    assert err < 1e-4, err

    print("KERNEL_OK")
</pallas_src>

<mosaic_0001>
module attributes {stable_mosaic.version = 11 : i64} {
  func.func @kernel(%arg0: i32, %arg1: i32, %arg2: memref<1x16x4xf32, #tpu.memory_space<vmem>>, %arg3: memref<1x16x2xf32, #tpu.memory_space<vmem>>, %arg4: memref<4x4xf32, #tpu.memory_space<vmem>>, %arg5: memref<4x4xf32, #tpu.memory_space<vmem>>, %arg6: memref<1x4xf32, #tpu.memory_space<vmem>>, %arg7: memref<3x4x8xf32, #tpu.memory_space<vmem>>, %arg8: memref<3x2x8xf32, #tpu.memory_space<vmem>>, %arg9: memref<1x8xf32, #tpu.memory_space<vmem>>, %arg10: memref<1x8xf32, #tpu.memory_space<vmem>>, %arg11: memref<1x8xf32, #tpu.memory_space<vmem>>, %arg12: memref<3x8x8xf32, #tpu.memory_space<vmem>>, %arg13: memref<1x8xf32, #tpu.memory_space<vmem>>, %arg14: memref<1x8xf32, #tpu.memory_space<vmem>>, %arg15: memref<1x8xf32, #tpu.memory_space<vmem>>, %arg16: memref<1x16x8xf32, #tpu.memory_space<vmem>>, %arg17: memref<2x8xf32, #tpu.memory_space<vmem>>, %arg18: memref<2x8xf32, #tpu.memory_space<vmem>>) attributes {dimension_semantics = [#tpu.dimension_semantics<arbitrary>, #tpu.dimension_semantics<arbitrary>], iteration_bounds = array<i64: 3, 2>, scalar_prefetch = 0 : i64, scratch_operands = 2 : i64, tpu.core_type = #tpu.core_type<tc>, window_params = [{transform_indices = @transform_0, window_bounds = array<i64: 1, 16, 4>}, {transform_indices = @transform_1, window_bounds = array<i64: 1, 16, 2>}, {pipeline_mode = #tpu.pipeline_mode<synchronous>, transform_indices = @transform_2, window_bounds = array<i64: 4, 4>}, {pipeline_mode = #tpu.pipeline_mode<synchronous>, transform_indices = @transform_3, window_bounds = array<i64: 4, 4>}, {pipeline_mode = #tpu.pipeline_mode<synchronous>, transform_indices = @transform_4, window_bounds = array<i64: 1, 4>}, {pipeline_mode = #tpu.pipeline_mode<synchronous>, transform_indices = @transform_5, window_bounds = array<i64: 3, 4, 8>}, {pipeline_mode = #tpu.pipeline_mode<synchronous>, transform_indices = @transform_6, window_bounds = array<i64: 3, 2, 8>}, {pipeline_mode = #tpu.pipeline_mode<synchronous>, transform_indices = @transform_7, window_bounds = array<i64: 1, 8>}, {pipeline_mode = #tpu.pipeline_mode<synchronous>, transform_indices = @transform_8, window_bounds = array<i64: 1, 8>}, {pipeline_mode = #tpu.pipeline_mode<synchronous>, transform_indices = @transform_9, window_bounds = array<i64: 1, 8>}, {pipeline_mode = #tpu.pipeline_mode<synchronous>, transform_indices = @transform_10, window_bounds = array<i64: 3, 8, 8>}, {pipeline_mode = #tpu.pipeline_mode<synchronous>, transform_indices = @transform_11, window_bounds = array<i64: 1, 8>}, {pipeline_mode = #tpu.pipeline_mode<synchronous>, transform_indices = @transform_12, window_bounds = array<i64: 1, 8>}, {pipeline_mode = #tpu.pipeline_mode<synchronous>, transform_indices = @transform_13, window_bounds = array<i64: 1, 8>}, {transform_indices = @transform_14, window_bounds = array<i64: 1, 16, 8>}]} {
    %c0_i32 = arith.constant 0 : i32
    %0 = arith.cmpi eq, %arg0, %c0_i32 : i32
    %c0_i32_0 = arith.constant 0 : i32
    %1 = arith.cmpi eq, %arg1, %c0_i32_0 : i32
    %2 = arith.andi %0, %1 : i1
    %3 = arith.extui %2 : i1 to i32
    %c0_i32_1 = arith.constant 0 : i32
    %4 = arith.cmpi ne, %3, %c0_i32_1 : i32
    scf.if %4 {
      %cst_54 = arith.constant 0.000000e+00 : f32
      %94 = vector.broadcast %cst_54 : f32 to vector<2x8xf32>
      %c0_55 = arith.constant 0 : index
      %c0_56 = arith.constant 0 : index
      %95 = vector.load %arg17[%c0_55, %c0_56] : memref<2x8xf32, #tpu.memory_space<vmem>>, vector<2x8xf32>
      tpu.vector_store %arg17[%c0_55, %c0_56], %94 {strides = array<i32>} : memref<2x8xf32, #tpu.memory_space<vmem>>, vector<2x8xf32>,
      %cst_57 = arith.constant 0.000000e+00 : f32
      %96 = vector.broadcast %cst_57 : f32 to vector<2x8xf32>
      %c0_58 = arith.constant 0 : index
      %c0_59 = arith.constant 0 : index
      %97 = vector.load %arg18[%c0_58, %c0_59] : memref<2x8xf32, #tpu.memory_space<vmem>>, vector<2x8xf32>
      tpu.vector_store %arg18[%c0_58, %c0_59], %96 {strides = array<i32>} : memref<2x8xf32, #tpu.memory_space<vmem>>, vector<2x8xf32>,
    } else {
    }
    %5 = tpu.iota {dimensions = array<i32: 0>} : vector<16x1xi32>
    %c0_i32_2 = arith.constant 0 : i32
    %6 = vector.broadcast %c0_i32_2 : i32 to vector<16x1xi32>
    %7 = arith.cmpi sge, %5, %6 : vector<16x1xi32>
    %c16_i32 = arith.constant 16 : i32
    %8 = vector.broadcast %c16_i32 : i32 to vector<16x1xi32>
    %9 = arith.cmpi slt, %5, %8 : vector<16x1xi32>
    %10 = arith.andi %7, %9 : vector<16x1xi1>
    %c0_i32_3 = arith.constant 0 : i32
    %11 = vector.broadcast %c0_i32_3 : i32 to vector<16x1xi32>
    %12 = arith.subi %5, %11 : vector<16x1xi32>
    %c2_i32 = arith.constant 2 : i32
    %c0_i32_4 = arith.constant 0 : i32
    %13 = arith.cmpi eq, %c2_i32, %c0_i32_4 : i32
    %c1_i32 = arith.constant 1 : i32
    %14 = arith.select %13, %c1_i32, %c2_i32 : i32
    %15 = vector.broadcast %14 : i32 to vector<16x1xi32>
    %16 = arith.remsi %12, %15 : vector<16x1xi32>
    %c0_i32_5 = arith.constant 0 : i32
    %17 = vector.broadcast %c0_i32_5 : i32 to vector<16x1xi32>
    %18 = arith.cmpi ne, %16, %17 : vector<16x1xi32>
    %c0_i32_6 = arith.constant 0 : i32
    %19 = vector.broadcast %c0_i32_6 : i32 to vector<16x1xi32>
    %20 = arith.cmpi slt, %16, %19 : vector<16x1xi32>
    %c0_i32_7 = arith.constant 0 : i32
    %21 = arith.cmpi slt, %14, %c0_i32_7 : i32
    %22 = vector.broadcast %21 : i1 to vector<16x1xi1>
    %23 = vector.broadcast %22 : vector<16x1xi1> to vector<16x1xi1>
    %24 = arith.xori %20, %23 : vector<16x1xi1>
    %25 = arith.andi %24, %18 : vector<16x1xi1>
    %26 = vector.broadcast %14 : i32 to vector<16x1xi32>
    %27 = arith.addi %16, %26 : vector<16x1xi32>
    %28 = arith.select %25, %27, %16 : vector<16x1xi1>, vector<16x1xi32>
    %c0_i32_8 = arith.constant 0 : i32
    %29 = vector.broadcast %c0_i32_8 : i32 to vector<16x1xi32>
    %30 = arith.cmpi eq, %28, %29 : vector<16x1xi32>
    %c0 = arith.constant 0 : index
    %c0_9 = arith.constant 0 : index
    %c0_10 = arith.constant 0 : index
    %31 = vector.load %arg2[%c0, %c0_9, %c0_10] : memref<1x16x4xf32, #tpu.memory_space<vmem>>, vector<1x16x4xf32>
    %32 = vector.shape_cast %31 : vector<1x16x4xf32> to vector<16x4xf32>
    %c0_11 = arith.constant 0 : index
    %c0_12 = arith.constant 0 : index
    %c0_13 = arith.constant 0 : index
    %33 = vector.load %arg3[%c0_11, %c0_12, %c0_13] : memref<1x16x2xf32, #tpu.memory_space<vmem>>, vector<1x16x2xf32>
    %34 = vector.shape_cast %33 : vector<1x16x2xf32> to vector<16x2xf32>
    %c0_14 = arith.constant 0 : index
    %c0_15 = arith.constant 0 : index
    %35 = vector.load %arg4[%c0_14, %c0_15] : memref<4x4xf32, #tpu.memory_space<vmem>>, vector<4x4xf32>
    %cst = arith.constant dense<0.000000e+00> : vector<16x4xf32>
    %36 = tpu.matmul %32, %35, %cst {dimension_numbers = #tpu.dot_dimension_numbers<[1], [0], [0], [1], [0, 0, 1, 1], [], []>} : vector<16x4xf32>, vector<4x4xf32>, vector<16x4xf32> -> vector<16x4xf32>
    %c0_16 = arith.constant 0 : index
    %c0_17 = arith.constant 0 : index
    %37 = vector.load %arg5[%c0_16, %c0_17] : memref<4x4xf32, #tpu.memory_space<vmem>>, vector<4x4xf32>
    %cst_18 = arith.constant dense<0.000000e+00> : vector<16x4xf32>
    %38 = tpu.matmul %32, %37, %cst_18 {dimension_numbers = #tpu.dot_dimension_numbers<[1], [0], [0], [1], [0, 0, 1, 1], [], []>} : vector<16x4xf32>, vector<4x4xf32>, vector<16x4xf32> -> vector<16x4xf32>
    %39 = vector.shape_cast %30 : vector<16x1xi1> to vector<16x1xi1>
    %40 = vector.broadcast %39 : vector<16x1xi1> to vector<16x4xi1>
    %41 = arith.select %40, %36, %38 : vector<16x4xi1>, vector<16x4xf32>
    %c0_19 = arith.constant 0 : index
    %c0_20 = arith.constant 0 : index
    %42 = vector.load %arg6[%c0_19, %c0_20] : memref<1x4xf32, #tpu.memory_space<vmem>>, vector<1x4xf32>
    %cst_21 = arith.constant 0.000000e+00 : f32
    %43 = vector.shape_cast %10 : vector<16x1xi1> to vector<16x1xi1>
    %44 = vector.broadcast %43 : vector<16x1xi1> to vector<16x4xi1>
    %45 = vector.shape_cast %42 : vector<1x4xf32> to vector<1x4xf32>
    %46 = vector.broadcast %45 : vector<1x4xf32> to vector<16x4xf32>
    %47 = vector.broadcast %cst_21 : f32 to vector<16x4xf32>
    %48 = arith.select %44, %46, %47 : vector<16x4xi1>, vector<16x4xf32>
    %49 = arith.addf %41, %48 : vector<16x4xf32>
    %c0_22 = arith.constant 0 : index
    %c0_23 = arith.constant 0 : index
    %50 = vector.load %arg9[%c0_22, %c0_23] : memref<1x8xf32, #tpu.memory_space<vmem>>, vector<1x8xf32>
    %cst_24 = arith.constant 0.000000e+00 : f32
    %51 = vector.broadcast %cst_24 : f32 to vector<2x4xf32>
    %52 = vector.extract_strided_slice %49 {offsets = [0, 0], sizes = [14, 4], strides = [1, 1]} : vector<16x4xf32> to vector<14x4xf32>
    %53 = tpu.concatenate %51, %52 in 0 : vector<2x4xf32>, vector<14x4xf32> -> vector<16x4xf32>
    %c0_25 = arith.constant 0 : index
    %c0_26 = arith.constant 0 : index
    %c0_27 = arith.constant 0 : index
    %54 = vector.load %arg7[%c0_25, %c0_26, %c0_27] : memref<3x4x8xf32, #tpu.memory_space<vmem>>, vector<1x4x8xf32>
    %55 = vector.shape_cast %54 : vector<1x4x8xf32> to vector<4x8xf32>
    %cst_28 = arith.constant dense<0.000000e+00> : vector<16x8xf32>
    %56 = tpu.matmul %53, %55, %cst_28 {dimension_numbers = #tpu.dot_dimension_numbers<[1], [0], [0], [1], [0, 0, 1, 1], [], []>} : vector<16x4xf32>, vector<4x8xf32>, vector<16x8xf32> -> vector<16x8xf32>
    %57 = vector.broadcast %50 : vector<1x8xf32> to vector<16x8xf32>
    %58 = arith.addf %57, %56 : vector<16x8xf32>
    %cst_29 = arith.constant 0.000000e+00 : f32
    %59 = vector.broadcast %cst_29 : f32 to vector<1x4xf32>
    %60 = vector.extract_strided_slice %49 {offsets = [0, 0], sizes = [15, 4], strides = [1, 1]} : vector<16x4xf32> to vector<15x4xf32>
    %61 = tpu.concatenate %59, %60 in 0 : vector<1x4xf32>, vector<15x4xf32> -> vector<16x4xf32>
    %c1 = arith.constant 1 : index
    %c0_30 = arith.constant 0 : index
    %c0_31 = arith.constant 0 : index
    %62 = vector.load %arg7[%c1, %c0_30, %c0_31] : memref<3x4x8xf32, #tpu.memory_space<vmem>>, vector<1x4x8xf32>
    %63 = vector.shape_cast %62 : vector<1x4x8xf32> to vector<4x8xf32>
    %cst_32 = arith.constant dense<0.000000e+00> : vector<16x8xf32>
    %64 = tpu.matmul %61, %63, %cst_32 {dimension_numbers = #tpu.dot_dimension_numbers<[1], [0], [0], [1], [0, 0, 1, 1], [], []>} : vector<16x4xf32>, vector<4x8xf32>, vector<16x8xf32> -> vector<16x8xf32>
    %65 = arith.addf %58, %64 : vector<16x8xf32>
    %c2 = arith.constant 2 : index
    %c0_33 = arith.constant 0 : index
    %c0_34 = arith.constant 0 : index
    %66 = vector.load %arg7[%c2, %c0_33, %c0_34] : memref<3x4x8xf32, #tpu.memory_space<vmem>>, vector<1x4x8xf32>
    %67 = vector.shape_cast %66 : vector<1x4x8xf32> to vector<4x8xf32>
    %cst_35 = arith.constant dense<0.000000e+00> : vector<16x8xf32>
    %68 = tpu.matmul %49, %67, %cst_35 {dimension_numbers = #tpu.dot_dimension_numbers<[1], [0], [0], [1], [0, 0, 1, 1], [], []>} : vector<16x4xf32>, vector<4x8xf32>, vector<16x8xf32> -> vector<16x8xf32>
    %69 = arith.addf %65, %68 : vector<16x8xf32>
    %cst_36 = arith.constant 0.000000e+00 : f32
    %70 = vector.broadcast %cst_36 : f32 to vector<2x2xf32>
    %71 = vector.extract_strided_slice %34 {offsets = [0, 0], sizes = [14, 2], strides = [1, 1]} : vector<16x2xf32> to vector<14x2xf32>
    %72 = tpu.concatenate %70, %71 in 0 : vector<2x2xf32>, vector<14x2xf32> -> vector<16x2xf32>
    %c0_37 = arith.constant 0 : index
    %c0_38 = arith.constant 0 : index
    %c0_39 = arith.constant 0 : index
    %73 = vector.load %arg8[%c0_37, %c0_38, %c0_39] : memref<3x2x8xf32, #tpu.memory_space<vmem>>, vector<1x2x8xf32>
    %74 = vector.shape_cast %73 : vector<1x2x8xf32> to vector<2x8xf32>
    %cst_40 = arith.constant dense<0.000000e+00> : vector<16x8xf32>
    %75 = tpu.matmul %72, %74, %cst_40 {dimension_numbers = #tpu.dot_dimension_numbers<[1], [0], [0], [1], [0, 0, 1, 1], [], []>} : vector<16x2xf32>, vector<2x8xf32>, vector<16x8xf32> -> vector<16x8xf32>
    %76 = arith.addf %69, %75 : vector<16x8xf32>
    %cst_41 = arith.constant 0.000000e+00 : f32
    %77 = vector.broadcast %cst_41 : f32 to vector<1x2xf32>
    %78 = vector.extract_strided_slice %34 {offsets = [0, 0], sizes = [15, 2], strides = [1, 1]} : vector<16x2xf32> to vector<15x2xf32>
    %79 = tpu.concatenate %77, %78 in 0 : vector<1x2xf32>, vector<15x2xf32> -> vector<16x2xf32>
    %c1_42 = arith.constant 1 : index
    %c0_43 = arith.constant 0 : index
    %c0_44 = arith.constant 0 : index
    %80 = vector.load %arg8[%c1_42, %c0_43, %c0_44] : memref<3x2x8xf32, #tpu.memory_space<vmem>>, vector<1x2x8xf32>
    %81 = vector.shape_cast %80 : vector<1x2x8xf32> to vector<2x8xf32>
    %cst_45 = arith.constant dense<0.000000e+00> : vector<16x8xf32>
    %82 = tpu.matmul %79, %81, %cst_45 {dimension_numbers = #tpu.dot_dimension_numbers<[1], [0], [0], [1], [0, 0, 1, 1], [], []>} : vector<16x2xf32>, vector<2x8xf32>, vector<16x8xf32> -> vector<16x8xf32>
    %83 = arith.addf %76, %82 : vector<16x8xf32>
    %c2_46 = arith.constant 2 : index
    %c0_47 = arith.constant 0 : index
    %c0_48 = arith.constant 0 : index
    %84 = vector.load %arg8[%c2_46, %c0_47, %c0_48] : memref<3x2x8xf32, #tpu.memory_space<vmem>>, vector<1x2x8xf32>
    %85 = vector.shape_cast %84 : vector<1x2x8xf32> to vector<2x8xf32>
    %cst_49 = arith.constant dense<0.000000e+00> : vector<16x8xf32>
    %86 = tpu.matmul %34, %85, %cst_49 {dimension_numbers = #tpu.dot_dimension_numbers<[1], [0], [0], [1], [0, 0, 1, 1], [], []>} : vector<16x2xf32>, vector<2x8xf32>, vector<16x8xf32> -> vector<16x8xf32>
    %87 = arith.addf %83, %86 : vector<16x8xf32>
    %c0_i32_50 = arith.constant 0 : i32
    %88 = arith.cmpi eq, %arg0, %c0_i32_50 : i32
    %89 = arith.extui %88 : i1 to i32
    %c0_i32_51 = arith.constant 0 : i32
    %90 = arith.cmpi ne, %89, %c0_i32_51 : i32
    scf.if %90 {
      %c0_54 = arith.constant 0 : index
      %c0_55 = arith.constant 0 : index
      %94 = vector.load %arg17[%c0_54, %c0_55] : memref<2x8xf32, #tpu.memory_space<vmem>>, vector<1x8xf32>
      %cst_56 = arith.constant dense<0.000000e+00> : vector<8xf32>
      %95 = vector.multi_reduction <add>, %87, %cst_56 [0] : vector<16x8xf32> to vector<8xf32>
      %96 = vector.shape_cast %95 : vector<8xf32> to vector<1x8xf32>
      %97 = arith.addf %94, %96 : vector<1x8xf32>
      %c0_57 = arith.constant 0 : index
      %c0_58 = arith.constant 0 : index
      %98 = vector.load %arg17[%c0_57, %c0_58] : memref<2x8xf32, #tpu.memory_space<vmem>>, vector<1x8xf32>
      tpu.vector_store %arg17[%c0_57, %c0_58], %97 {strides = array<i32>} : memref<2x8xf32, #tpu.memory_space<vmem>>, vector<1x8xf32>,
      %c1_59 = arith.constant 1 : index
      %c0_60 = arith.constant 0 : index
      %99 = vector.load %arg17[%c1_59, %c0_60] : memref<2x8xf32, #tpu.memory_space<vmem>>, vector<1x8xf32>
      %100 = arith.mulf %87, %87 : vector<16x8xf32>
      %cst_61 = arith.constant dense<0.000000e+00> : vector<8xf32>
      %101 = vector.multi_reduction <add>, %100, %cst_61 [0] : vector<16x8xf32> to vector<8xf32>
      %102 = vector.shape_cast %101 : vector<8xf32> to vector<1x8xf32>
      %103 = arith.addf %99, %102 : vector<1x8xf32>
      %c1_62 = arith.constant 1 : index
      %c0_63 = arith.constant 0 : index
      %104 = vector.load %arg17[%c1_62, %c0_63] : memref<2x8xf32, #tpu.memory_space<vmem>>, vector<1x8xf32>
      tpu.vector_store %arg17[%c1_62, %c0_63], %103 {strides = array<i32>} : memref<2x8xf32, #tpu.memory_space<vmem>>, vector<1x8xf32>,
    } else {
    }
    %c1_i32_52 = arith.constant 1 : i32
    %91 = arith.cmpi sge, %arg0, %c1_i32_52 : i32
    %92 = arith.extui %91 : i1 to i32
    %c0_i32_53 = arith.constant 0 : i32
    %93 = arith.cmpi ne, %92, %c0_i32_53 : i32
    scf.if %93 {
      %c0_54 = arith.constant 0 : index
      %c0_55 = arith.constant 0 : index
      %94 = vector.load %arg17[%c0_54, %c0_55] : memref<2x8xf32, #tpu.memory_space<vmem>>, vector<1x8xf32>
      %cst_56 = arith.constant 3.125000e-02 : f32
      %95 = vector.broadcast %cst_56 : f32 to vector<1x8xf32>
      %96 = arith.mulf %94, %95 : vector<1x8xf32>
      %c1_57 = arith.constant 1 : index
      %c0_58 = arith.constant 0 : index
      %97 = vector.load %arg17[%c1_57, %c0_58] : memref<2x8xf32, #tpu.memory_space<vmem>>, vector<1x8xf32>
      %cst_59 = arith.constant 3.125000e-02 : f32
      %98 = vector.broadcast %cst_59 : f32 to vector<1x8xf32>
      %99 = arith.mulf %97, %98 : vector<1x8xf32>
      %100 = arith.mulf %96, %96 : vector<1x8xf32>
      %101 = arith.subf %99, %100 : vector<1x8xf32>
      %c0_60 = arith.constant 0 : index
      %c0_61 = arith.constant 0 : index
      %102 = vector.load %arg10[%c0_60, %c0_61] : memref<1x8xf32, #tpu.memory_space<vmem>>, vector<1x8xf32>
      %cst_62 = arith.constant 9.99999974E-6 : f32
      %103 = vector.broadcast %cst_62 : f32 to vector<1x8xf32>
      %104 = arith.addf %101, %103 : vector<1x8xf32>
      %105 = math.rsqrt %104 : vector<1x8xf32>
      %106 = arith.mulf %102, %105 : vector<1x8xf32>
      %107 = vector.broadcast %106 : vector<1x8xf32> to vector<16x8xf32>
      %108 = arith.mulf %87, %107 : vector<16x8xf32>
      %c0_63 = arith.constant 0 : index
      %c0_64 = arith.constant 0 : index
      %109 = vector.load %arg11[%c0_63, %c0_64] : memref<1x8xf32, #tpu.memory_space<vmem>>, vector<1x8xf32>
      %110 = arith.mulf %96, %106 : vector<1x8xf32>
      %111 = arith.subf %109, %110 : vector<1x8xf32>
      %112 = vector.broadcast %111 : vector<1x8xf32> to vector<16x8xf32>
      %113 = arith.addf %108, %112 : vector<16x8xf32>
      %cst_65 = arith.constant 0.000000e+00 : f32
      %114 = vector.broadcast %cst_65 : f32 to vector<16x8xf32>
      %115 = arith.maximumf %113, %114 : vector<16x8xf32>
      %c0_66 = arith.constant 0 : index
      %c0_67 = arith.constant 0 : index
      %116 = vector.load %arg13[%c0_66, %c0_67] : memref<1x8xf32, #tpu.memory_space<vmem>>, vector<1x8xf32>
      %cst_68 = arith.constant 0.000000e+00 : f32
      %117 = vector.broadcast %cst_68 : f32 to vector<2x8xf32>
      %118 = vector.extract_strided_slice %115 {offsets = [0, 0], sizes = [14, 8], strides = [1, 1]} : vector<16x8xf32> to vector<14x8xf32>
      %119 = tpu.concatenate %117, %118 in 0 : vector<2x8xf32>, vector<14x8xf32> -> vector<16x8xf32>
      %c0_69 = arith.constant 0 : index
      %c0_70 = arith.constant 0 : index
      %c0_71 = arith.constant 0 : index
      %120 = vector.load %arg12[%c0_69, %c0_70, %c0_71] : memref<3x8x8xf32, #tpu.memory_space<vmem>>, vector<1x8x8xf32>
      %121 = vector.shape_cast %120 : vector<1x8x8xf32> to vector<8x8xf32>
      %cst_72 = arith.constant dense<0.000000e+00> : vector<16x8xf32>
      %122 = tpu.matmul %119, %121, %cst_72 {dimension_numbers = #tpu.dot_dimension_numbers<[1], [0], [0], [1], [0, 0, 1, 1], [], []>} : vector<16x8xf32>, vector<8x8xf32>, vector<16x8xf32> -> vector<16x8xf32>
      %123 = vector.broadcast %116 : vector<1x8xf32> to vector<16x8xf32>
      %124 = arith.addf %123, %122 : vector<16x8xf32>
      %cst_73 = arith.constant 0.000000e+00 : f32
      %125 = vector.broadcast %cst_73 : f32 to vector<1x8xf32>
      %126 = vector.extract_strided_slice %115 {offsets = [0, 0], sizes = [15, 8], strides = [1, 1]} : vector<16x8xf32> to vector<15x8xf32>
      %127 = tpu.concatenate %125, %126 in 0 : vector<1x8xf32>, vector<15x8xf32> -> vector<16x8xf32>
      %c1_74 = arith.constant 1 : index
      %c0_75 = arith.constant 0 : index
      %c0_76 = arith.constant 0 : index
      %128 = vector.load %arg12[%c1_74, %c0_75, %c0_76] : memref<3x8x8xf32, #tpu.memory_space<vmem>>, vector<1x8x8xf32>
      %129 = vector.shape_cast %128 : vector<1x8x8xf32> to vector<8x8xf32>
      %cst_77 = arith.constant dense<0.000000e+00> : vector<16x8xf32>
      %130 = tpu.matmul %127, %129, %cst_77 {dimension_numbers = #tpu.dot_dimension_numbers<[1], [0], [0], [1], [0, 0, 1, 1], [], []>} : vector<16x8xf32>, vector<8x8xf32>, vector<16x8xf32> -> vector<16x8xf32>
      %131 = arith.addf %124, %130 : vector<16x8xf32>
      %c2_78 = arith.constant 2 : index
      %c0_79 = arith.constant 0 : index
      %c0_80 = arith.constant 0 : index
      %132 = vector.load %arg12[%c2_78, %c0_79, %c0_80] : memref<3x8x8xf32, #tpu.memory_space<vmem>>, vector<1x8x8xf32>
      %133 = vector.shape_cast %132 : vector<1x8x8xf32> to vector<8x8xf32>
      %cst_81 = arith.constant dense<0.000000e+00> : vector<16x8xf32>
      %134 = tpu.matmul %115, %133, %cst_81 {dimension_numbers = #tpu.dot_dimension_numbers<[1], [0], [0], [1], [0, 0, 1, 1], [], []>} : vector<16x8xf32>, vector<8x8xf32>, vector<16x8xf32> -> vector<16x8xf32>
      %135 = arith.addf %131, %134 : vector<16x8xf32>
      %c1_i32_82 = arith.constant 1 : i32
      %136 = arith.cmpi eq, %arg0, %c1_i32_82 : i32
      %137 = arith.extui %136 : i1 to i32
      %c0_i32_83 = arith.constant 0 : i32
      %138 = arith.cmpi ne, %137, %c0_i32_83 : i32
      scf.if %138 {
        %c0_86 = arith.constant 0 : index
        %c0_87 = arith.constant 0 : index
        %142 = vector.load %arg18[%c0_86, %c0_87] : memref<2x8xf32, #tpu.memory_space<vmem>>, vector<1x8xf32>
        %cst_88 = arith.constant dense<0.000000e+00> : vector<8xf32>
        %143 = vector.multi_reduction <add>, %135, %cst_88 [0] : vector<16x8xf32> to vector<8xf32>
        %144 = vector.shape_cast %143 : vector<8xf32> to vector<1x8xf32>
        %145 = arith.addf %142, %144 : vector<1x8xf32>
        %c0_89 = arith.constant 0 : index
        %c0_90 = arith.constant 0 : index
        %146 = vector.load %arg18[%c0_89, %c0_90] : memref<2x8xf32, #tpu.memory_space<vmem>>, vector<1x8xf32>
        tpu.vector_store %arg18[%c0_89, %c0_90], %145 {strides = array<i32>} : memref<2x8xf32, #tpu.memory_space<vmem>>, vector<1x8xf32>,
        %c1_91 = arith.constant 1 : index
        %c0_92 = arith.constant 0 : index
        %147 = vector.load %arg18[%c1_91, %c0_92] : memref<2x8xf32, #tpu.memory_space<vmem>>, vector<1x8xf32>
        %148 = arith.mulf %135, %135 : vector<16x8xf32>
        %cst_93 = arith.constant dense<0.000000e+00> : vector<8xf32>
        %149 = vector.multi_reduction <add>, %148, %cst_93 [0] : vector<16x8xf32> to vector<8xf32>
        %150 = vector.shape_cast %149 : vector<8xf32> to vector<1x8xf32>
        %151 = arith.addf %147, %150 : vector<1x8xf32>
        %c1_94 = arith.constant 1 : index
        %c0_95 = arith.constant 0 : index
        %152 = vector.load %arg18[%c1_94, %c0_95] : memref<2x8xf32, #tpu.memory_space<vmem>>, vector<1x8xf32>
        tpu.vector_store %arg18[%c1_94, %c0_95], %151 {strides = array<i32>} : memref<2x8xf32, #tpu.memory_space<vmem>>, vector<1x8xf32>,
      } else {
      }
      %c2_i32_84 = arith.constant 2 : i32
      %139 = arith.cmpi eq, %arg0, %c2_i32_84 : i32
      %140 = arith.extui %139 : i1 to i32
      %c0_i32_85 = arith.constant 0 : i32
      %141 = arith.cmpi ne, %140, %c0_i32_85 : i32
      scf.if %141 {
        %c0_86 = arith.constant 0 : index
        %c0_87 = arith.constant 0 : index
        %142 = vector.load %arg18[%c0_86, %c0_87] : memref<2x8xf32, #tpu.memory_space<vmem>>, vector<1x8xf32>
        %cst_88 = arith.constant 3.125000e-02 : f32
        %143 = vector.broadcast %cst_88 : f32 to vector<1x8xf32>
        %144 = arith.mulf %142, %143 : vector<1x8xf32>
        %c1_89 = arith.constant 1 : index
        %c0_90 = arith.constant 0 : index
        %145 = vector.load %arg18[%c1_89, %c0_90] : memref<2x8xf32, #tpu.memory_space<vmem>>, vector<1x8xf32>
        %cst_91 = arith.constant 3.125000e-02 : f32
        %146 = vector.broadcast %cst_91 : f32 to vector<1x8xf32>
        %147 = arith.mulf %145, %146 : vector<1x8xf32>
        %148 = arith.mulf %144, %144 : vector<1x8xf32>
        %149 = arith.subf %147, %148 : vector<1x8xf32>
        %c0_92 = arith.constant 0 : index
        %c0_93 = arith.constant 0 : index
        %150 = vector.load %arg14[%c0_92, %c0_93] : memref<1x8xf32, #tpu.memory_space<vmem>>, vector<1x8xf32>
        %cst_94 = arith.constant 9.99999974E-6 : f32
        %151 = vector.broadcast %cst_94 : f32 to vector<1x8xf32>
        %152 = arith.addf %149, %151 : vector<1x8xf32>
        %153 = math.rsqrt %152 : vector<1x8xf32>
        %154 = arith.mulf %150, %153 : vector<1x8xf32>
        %155 = vector.broadcast %154 : vector<1x8xf32> to vector<16x8xf32>
        %156 = arith.mulf %135, %155 : vector<16x8xf32>
        %c0_95 = arith.constant 0 : index
        %c0_96 = arith.constant 0 : index
        %157 = vector.load %arg15[%c0_95, %c0_96] : memref<1x8xf32, #tpu.memory_space<vmem>>, vector<1x8xf32>
        %158 = arith.mulf %144, %154 : vector<1x8xf32>
        %159 = arith.subf %157, %158 : vector<1x8xf32>
        %160 = vector.broadcast %159 : vector<1x8xf32> to vector<16x8xf32>
        %161 = arith.addf %156, %160 : vector<16x8xf32>
        %cst_97 = arith.constant 0.000000e+00 : f32
        %162 = vector.broadcast %cst_97 : f32 to vector<16x8xf32>
        %163 = arith.maximumf %161, %162 : vector<16x8xf32>
        %c0_98 = arith.constant 0 : index
        %c0_99 = arith.constant 0 : index
        %c0_100 = arith.constant 0 : index
        %164 = vector.load %arg16[%c0_98, %c0_99, %c0_100] : memref<1x16x8xf32, #tpu.memory_space<vmem>>, vector<1x16x8xf32>
        %165 = vector.shape_cast %164 : vector<1x16x8xf32> to vector<16x8xf32>
        %166 = vector.shape_cast %163 : vector<16x8xf32> to vector<1x16x8xf32>
        tpu.vector_store %arg16[%c0_98, %c0_99, %c0_100], %166 {strides = array<i32>} : memref<1x16x8xf32, #tpu.memory_space<vmem>>, vector<1x16x8xf32>,
      } else {
      }
    } else {
    }
    return
  }
  func.func @transform_0(%arg0: i32, %arg1: i32) -> (i32, i32, i32) {
    %c0_i32 = arith.constant 0 : i32
    %c0_i32_0 = arith.constant 0 : i32
    %c0_i32_1 = arith.constant 0 : i32
    return %arg1, %c0_i32, %c0_i32_0 : i32, i32, i32
  }
  func.func @transform_1(%arg0: i32, %arg1: i32) -> (i32, i32, i32) {
    %c0_i32 = arith.constant 0 : i32
    %c0_i32_0 = arith.constant 0 : i32
    %c0_i32_1 = arith.constant 0 : i32
    return %arg1, %c0_i32, %c0_i32_0 : i32, i32, i32
  }
  func.func @transform_2(%arg0: i32, %arg1: i32) -> (i32, i32) {
    %c0_i32 = arith.constant 0 : i32
    %c0_i32_0 = arith.constant 0 : i32
    %c0_i32_1 = arith.constant 0 : i32
    return %c0_i32, %c0_i32_0 : i32, i32
  }
  func.func @transform_3(%arg0: i32, %arg1: i32) -> (i32, i32) {
    %c0_i32 = arith.constant 0 : i32
    %c0_i32_0 = arith.constant 0 : i32
    %c0_i32_1 = arith.constant 0 : i32
    return %c0_i32, %c0_i32_0 : i32, i32
  }
  func.func @transform_4(%arg0: i32, %arg1: i32) -> (i32, i32) {
    %c0_i32 = arith.constant 0 : i32
    %c0_i32_0 = arith.constant 0 : i32
    %c0_i32_1 = arith.constant 0 : i32
    return %c0_i32, %c0_i32_0 : i32, i32
  }
  func.func @transform_5(%arg0: i32, %arg1: i32) -> (i32, i32, i32) {
    %c0_i32 = arith.constant 0 : i32
    %c0_i32_0 = arith.constant 0 : i32
    %c0_i32_1 = arith.constant 0 : i32
    %c0_i32_2 = arith.constant 0 : i32
    return %c0_i32, %c0_i32_0, %c0_i32_1 : i32, i32, i32
  }
  func.func @transform_6(%arg0: i32, %arg1: i32) -> (i32, i32, i32) {
    %c0_i32 = arith.constant 0 : i32
    %c0_i32_0 = arith.constant 0 : i32
    %c0_i32_1 = arith.constant 0 : i32
    %c0_i32_2 = arith.constant 0 : i32
    return %c0_i32, %c0_i32_0, %c0_i32_1 : i32, i32, i32
  }
  func.func @transform_7(%arg0: i32, %arg1: i32) -> (i32, i32) {
    %c0_i32 = arith.constant 0 : i32
    %c0_i32_0 = arith.constant 0 : i32
    %c0_i32_1 = arith.constant 0 : i32
    return %c0_i32, %c0_i32_0 : i32, i32
  }
  func.func @transform_8(%arg0: i32, %arg1: i32) -> (i32, i32) {
    %c0_i32 = arith.constant 0 : i32
    %c0_i32_0 = arith.constant 0 : i32
    %c0_i32_1 = arith.constant 0 : i32
    return %c0_i32, %c0_i32_0 : i32, i32
  }
  func.func @transform_9(%arg0: i32, %arg1: i32) -> (i32, i32) {
    %c0_i32 = arith.constant 0 : i32
    %c0_i32_0 = arith.constant 0 : i32
    %c0_i32_1 = arith.constant 0 : i32
    return %c0_i32, %c0_i32_0 : i32, i32
  }
  func.func @transform_10(%arg0: i32, %arg1: i32) -> (i32, i32, i32) {
    %c0_i32 = arith.constant 0 : i32
    %c0_i32_0 = arith.constant 0 : i32
    %c0_i32_1 = arith.constant 0 : i32
    %c0_i32_2 = arith.constant 0 : i32
    return %c0_i32, %c0_i32_0, %c0_i32_1 : i32, i32, i32
  }
  func.func @transform_11(%arg0: i32, %arg1: i32) -> (i32, i32) {
    %c0_i32 = arith.constant 0 : i32
    %c0_i32_0 = arith.constant 0 : i32
    %c0_i32_1 = arith.constant 0 : i32
    return %c0_i32, %c0_i32_0 : i32, i32
  }
  func.func @transform_12(%arg0: i32, %arg1: i32) -> (i32, i32) {
    %c0_i32 = arith.constant 0 : i32
    %c0_i32_0 = arith.constant 0 : i32
    %c0_i32_1 = arith.constant 0 : i32
    return %c0_i32, %c0_i32_0 : i32, i32
  }
  func.func @transform_13(%arg0: i32, %arg1: i32) -> (i32, i32) {
    %c0_i32 = arith.constant 0 : i32
    %c0_i32_0 = arith.constant 0 : i32
    %c0_i32_1 = arith.constant 0 : i32
    return %c0_i32, %c0_i32_0 : i32, i32
  }
  func.func @transform_14(%arg0: i32, %arg1: i32) -> (i32, i32, i32) {
    %c2_i32 = arith.constant 2 : i32
    %0 = arith.cmpi eq, %arg0, %c2_i32 : i32
    %c0_i32 = arith.constant 0 : i32
    %1 = arith.select %0, %arg1, %c0_i32 : i32
    %c0_i32_0 = arith.constant 0 : i32
    %c0_i32_1 = arith.constant 0 : i32
    %c0_i32_2 = arith.constant 0 : i32
    return %1, %c0_i32_0, %c0_i32_1 : i32, i32, i32
  }
}

</mosaic_0001>

<llo_original>
// kernel: up_causal2_pallas.1
$region0: #{up_causal2_pallas.1}
  #allocation0 [shape = 'u32[]', space=smem, size = 0x4, offset = 0x4, fixed_abs, tag = 'smem constant byte address 0x4 - core index']
  #allocation1 [shape = 'u32[144,128]{1,0:T(1,128)}', space=vmem, size = 0x12000, scoped, tag = 'internal scratch']
  #allocation2 [shape = 'f32[2,8]{1,0:T(2,128)}', space=vmem, size = 0x400, scoped, tag = 'scratch operand']
  #allocation3 [shape = 'f32[2,8]{1,0:T(2,128)}', space=vmem, size = 0x400, scoped, tag = 'scratch operand']
  %s0 = inlined_call_operand.vmem [shape: f32[2,16,4], index: 0, kind: input, shape index: {}]
  %s1 = inlined_call_operand.vmem [shape: f32[2,16,2], index: 1, kind: input, shape index: {}]
  %s2 = inlined_call_operand.vmem [shape: f32[4,4], index: 2, kind: input, shape index: {}]
  %s3 = inlined_call_operand.vmem [shape: f32[4,4], index: 3, kind: input, shape index: {}]
  %s4 = inlined_call_operand.vmem [shape: f32[1,4], index: 4, kind: input, shape index: {}]
  %s5 = inlined_call_operand.vmem [shape: f32[3,4,8], index: 5, kind: input, shape index: {}]
  %s6 = inlined_call_operand.vmem [shape: f32[3,2,8], index: 6, kind: input, shape index: {}]
  %s7 = inlined_call_operand.vmem [shape: f32[1,8], index: 7, kind: input, shape index: {}]
  %s8 = inlined_call_operand.vmem [shape: f32[1,8], index: 8, kind: input, shape index: {}]
  %s9 = inlined_call_operand.vmem [shape: f32[1,8], index: 9, kind: input, shape index: {}]
  %s10 = inlined_call_operand.vmem [shape: f32[3,8,8], index: 10, kind: input, shape index: {}]
  %s11 = inlined_call_operand.vmem [shape: f32[1,8], index: 11, kind: input, shape index: {}]
  %s12 = inlined_call_operand.vmem [shape: f32[1,8], index: 12, kind: input, shape index: {}]
  %s13 = inlined_call_operand.vmem [shape: f32[1,8], index: 13, kind: input, shape index: {}]
  %s14 = inlined_call_operand.vmem [shape: f32[2,16,8], index: 14, kind: output, shape index: {}]
  %s15 = sld [smem:[#allocation0]]
  $region109: #{up_causal2_pallas.1} parent=0
    _
  %s17 = ssub.s32 1, %s15
  %s18 = scalar_select 0, %s17, %s15
  loop: start=0, step=1, limit=8
  $region2: #{up_causal2_pallas.1} parent=0 // loop_pre_header
    _
  $region3: #{up_causal2_pallas.1} parent=0 // loop_header
    %s20 = sphi 0, %s24
    %p21 = scmp.ge.s32.totalorder %s20, 8
    %s27 = sphi 0, %s39
    %s28 = sphi 0, %s35
    %s29 = sphi 0, %s27
    %s30 = sphi 0, %s28
    %s31 = sphi 0, %s29
    %s32 = sphi 0, %s30
    %s42 = sphi 0, %s44
    %s45 = sphi 0, %s42
    %s46 = sphi 0, %s45
    %s62 = sphi 0, %s46
    %s68 = sphi 0, %s70
    %s71 = sphi 0, %s68
    %s72 = sphi 0, %s71
    %s88 = sphi 0, %s72
    %s92 = sphi 0, %s92
    %s94 = sphi 0, %s92
    %s95 = sphi 0, %s94
    %s109 = sphi 0, %s95
    %s113 = sphi 0, %s113
    %s115 = sphi 0, %s113
    %s116 = sphi 0, %s115
    %s130 = sphi 0, %s116
    %s134 = sphi 0, %s134
    %s136 = sphi 0, %s134
    %s137 = sphi 0, %s136
    %s151 = sphi 0, %s137
    %s155 = sphi 0, %s155
    %s157 = sphi 0, %s155
    %s158 = sphi 0, %s157
    %s172 = sphi 0, %s158
    %s176 = sphi 0, %s176
    %s178 = sphi 0, %s176
    %s179 = sphi 0, %s178
    %s193 = sphi 0, %s179
    %s197 = sphi 0, %s197
    %s199 = sphi 0, %s197
    %s200 = sphi 0, %s199
    %s214 = sphi 0, %s200
    %s218 = sphi 0, %s218
    %s220 = sphi 0, %s218
    %s221 = sphi 0, %s220
    %s235 = sphi 0, %s221
    %s239 = sphi 0, %s239
    %s241 = sphi 0, %s239
    %s242 = sphi 0, %s241
    %s256 = sphi 0, %s242
    %s260 = sphi 0, %s260
    %s262 = sphi 0, %s260
    %s263 = sphi 0, %s262
    %s277 = sphi 0, %s263
    %s281 = sphi 0, %s281
    %s283 = sphi 0, %s281
    %s284 = sphi 0, %s283
    %s298 = sphi 0, %s284
    %s302 = sphi 0, %s302
    %s304 = sphi 0, %s302
    %s305 = sphi 0, %s304
    %s319 = sphi 0, %s305
    %s323 = sphi 0, %s323
    %s325 = sphi 0, %s323
    %s326 = sphi 0, %s325
    %s340 = sphi 0, %s326
    %s350 = sphi 0, %s352
    %s353 = sphi 0, %s350
    %s354 = sphi 0, %s353
    %s370 = sphi 0, %s354
  $region4: #{up_causal2_pallas.1} parent=0 // loop_header_branch
    %23 = sbr.rel (%p21) target = $region8
  $region5: #{up_causal2_pallas.1} parent=0 // loop_body
    %s25 = ssub.s32 %s20, 1
    %s26 = ssub.s32 %s20, 2
    %s33 = sadd.s32 1, %s28
    %p34 = scmp.ge.s32.totalorder %s33, 2
    %s35 = scalar_select %p34, 0, %s33
    %s36 = sadd.s32 1, %s27
    %s37 = scalar_select %p34, %s36, %s27
    %p38 = scmp.ge.s32.totalorder %s37, 3
    %s39 = scalar_select %p38, 0, %s37
    %s40 = ssub.s32 %s28, %s35
    %p41 = scmp.eq.s32.totalorder %s40, 0
    %s43 = sadd.s32 %s42, 1
    %s44 = scalar_select %p41, %s42, %s43
    %p47 = pneg %p41
    %p48 = scmp.eq.s32.totalorder %s20, 5
    %p49 = por %p47, %p48
    %p50 = scmp.ne.s32.totalorder %s42, %s45
    %p51 = scmp.eq.s32.totalorder %s20, 0
    %p52 = por %p50, %p51
    %p53 = scmp.ne.s32.totalorder %s42, %s45
    %p54 = scmp.eq.s32.totalorder %s25, 5
    %p55 = por %p53, %p54
    %p56 = scmp.ne.s32.totalorder %s45, %s46
    %p57 = scmp.eq.s32.totalorder %s25, 0
    %p58 = por %p56, %p57
    %p59 = scmp.ne.s32.totalorder %s45, %s46
    %p60 = scmp.eq.s32.totalorder %s26, 5
    %p61 = por %p59, %p60
    %p63 = scmp.ne.s32.totalorder %s46, %s62
    %p64 = scmp.eq.s32.totalorder %s26, 0
    %p65 = por %p63, %p64
    %s66 = ssub.s32 %s28, %s35
    %p67 = scmp.eq.s32.totalorder %s66, 0
    %s69 = sadd.s32 %s68, 1
    %s70 = scalar_select %p67, %s68, %s69
    %p73 = pneg %p67
    %p74 = scmp.eq.s32.totalorder %s20, 5
    %p75 = por %p73, %p74
    %p76 = scmp.ne.s32.totalorder %s68, %s71
    %p77 = scmp.eq.s32.totalorder %s20, 0
    %p78 = por %p76, %p77
    %p79 = scmp.ne.s32.totalorder %s68, %s71
    %p80 = scmp.eq.s32.totalorder %s25, 5
    %p81 = por %p79, %p80
    %p82 = scmp.ne.s32.totalorder %s71, %s72
    %p83 = scmp.eq.s32.totalorder %s25, 0
    %p84 = por %p82, %p83
    %p85 = scmp.ne.s32.totalorder %s71, %s72
    %p86 = scmp.eq.s32.totalorder %s26, 5
    %p87 = por %p85, %p86
    %p89 = scmp.ne.s32.totalorder %s72, %s88
    %p90 = scmp.eq.s32.totalorder %s26, 0
    %p91 = por %p89, %p90
    %s93 = sadd.s32 %s92, 1
    %p96 = scmp.eq.s32.totalorder %s20, 5
    %p97 = scmp.ne.s32.totalorder %s92, %s94
    %p98 = scmp.eq.s32.totalorder %s20, 0
    %p99 = por %p97, %p98
    %p100 = scmp.ne.s32.totalorder %s92, %s94
    %p101 = scmp.eq.s32.totalorder %s25, 5
    %p102 = por %p100, %p101
    %p103 = scmp.ne.s32.totalorder %s94, %s95
    %p104 = scmp.eq.s32.totalorder %s25, 0
    %p105 = por %p103, %p104
    %p106 = scmp.ne.s32.totalorder %s94, %s95
    %p107 = scmp.eq.s32.totalorder %s26, 5
    %p108 = por %p106, %p107
    %p110 = scmp.ne.s32.totalorder %s95, %s109
    %p111 = scmp.eq.s32.totalorder %s26, 0
    %p112 = por %p110, %p111
    %s114 = sadd.s32 %s113, 1
    %p117 = scmp.eq.s32.totalorder %s20, 5
    %p118 = scmp.ne.s32.totalorder %s113, %s115
    %p119 = scmp.eq.s32.totalorder %s20, 0
    %p120 = por %p118, %p119
    %p121 = scmp.ne.s32.totalorder %s113, %s115
    %p122 = scmp.eq.s32.totalorder %s25, 5
    %p123 = por %p121, %p122
    %p124 = scmp.ne.s32.totalorder %s115, %s116
    %p125 = scmp.eq.s32.totalorder %s25, 0
    %p126 = por %p124, %p125
    %p127 = scmp.ne.s32.totalorder %s115, %s116
    %p128 = scmp.eq.s32.totalorder %s26, 5
    %p129 = por %p127, %p128
    %p131 = scmp.ne.s32.totalorder %s116, %s130
    %p132 = scmp.eq.s32.totalorder %s26, 0
    %p133 = por %p131, %p132
    %s135 = sadd.s32 %s134, 1
    %p138 = scmp.eq.s32.totalorder %s20, 5
    %p139 = scmp.ne.s32.totalorder %s134, %s136
    %p140 = scmp.eq.s32.totalorder %s20, 0
    %p141 = por %p139, %p140
    %p142 = scmp.ne.s32.totalorder %s134, %s136
    %p143 = scmp.eq.s32.totalorder %s25, 5
    %p144 = por %p142, %p143
    %p145 = scmp.ne.s32.totalorder %s136, %s137
    %p146 = scmp.eq.s32.totalorder %s25, 0
    %p147 = por %p145, %p146
    %p148 = scmp.ne.s32.totalorder %s136, %s137
    %p149 = scmp.eq.s32.totalorder %s26, 5
    %p150 = por %p148, %p149
    %p152 = scmp.ne.s32.totalorder %s137, %s151
    %p153 = scmp.eq.s32.totalorder %s26, 0
    %p154 = por %p152, %p153
    %s156 = sadd.s32 %s155, 1
    %p159 = scmp.eq.s32.totalorder %s20, 5
    %p160 = scmp.ne.s32.totalorder %s155, %s157
    %p161 = scmp.eq.s32.totalorder %s20, 0
    %p162 = por %p160, %p161
    %p163 = scmp.ne.s32.totalorder %s155, %s157
    %p164 = scmp.eq.s32.totalorder %s25, 5
    %p165 = por %p163, %p164
    %p166 = scmp.ne.s32.totalorder %s157, %s158
    %p167 = scmp.eq.s32.totalorder %s25, 0
    %p168 = por %p166, %p167
    %p169 = scmp.ne.s32.totalorder %s157, %s158
    %p170 = scmp.eq.s32.totalorder %s26, 5
    %p171 = por %p169, %p170
    %p173 = scmp.ne.s32.totalorder %s158, %s172
    %p174 = scmp.eq.s32.totalorder %s26, 0
    %p175 = por %p173, %p174
    %s177 = sadd.s32 %s176, 1
    %p180 = scmp.eq.s32.totalorder %s20, 5
    %p181 = scmp.ne.s32.totalorder %s176, %s178
    %p182 = scmp.eq.s32.totalorder %s20, 0
    %p183 = por %p181, %p182
    %p184 = scmp.ne.s32.totalorder %s176, %s178
    %p185 = scmp.eq.s32.totalorder %s25, 5
    %p186 = por %p184, %p185
    %p187 = scmp.ne.s32.totalorder %s178, %s179
    %p188 = scmp.eq.s32.totalorder %s25, 0
    %p189 = por %p187, %p188
    %p190 = scmp.ne.s32.totalorder %s178, %s179
    %p191 = scmp.eq.s32.totalorder %s26, 5
    %p192 = por %p190, %p191
    %p194 = scmp.ne.s32.totalorder %s179, %s193
    %p195 = scmp.eq.s32.totalorder %s26, 0
    %p196 = por %p194, %p195
    %s198 = sadd.s32 %s197, 1
    %p201 = scmp.eq.s32.totalorder %s20, 5
    %p202 = scmp.ne.s32.totalorder %s197, %s199
    %p203 = scmp.eq.s32.totalorder %s20, 0
    %p204 = por %p202, %p203
    %p205 = scmp.ne.s32.totalorder %s197, %s199
    %p206 = scmp.eq.s32.totalorder %s25, 5
    %p207 = por %p205, %p206
    %p208 = scmp.ne.s32.totalorder %s199, %s200
    %p209 = scmp.eq.s32.totalorder %s25, 0
    %p210 = por %p208, %p209
    %p211 = scmp.ne.s32.totalorder %s199, %s200
    %p212 = scmp.eq.s32.totalorder %s26, 5
    %p213 = por %p211, %p212
    %p215 = scmp.ne.s32.totalorder %s200, %s214
    %p216 = scmp.eq.s32.totalorder %s26, 0
    %p217 = por %p215, %p216
    %s219 = sadd.s32 %s218, 1
    %p222 = scmp.eq.s32.totalorder %s20, 5
    %p223 = scmp.ne.s32.totalorder %s218, %s220
    %p224 = scmp.eq.s32.totalorder %s20, 0
    %p225 = por %p223, %p224
    %p226 = scmp.ne.s32.totalorder %s218, %s220
    %p227 = scmp.eq.s32.totalorder %s25, 5
    %p228 = por %p226, %p227
    %p229 = scmp.ne.s32.totalorder %s220, %s221
    %p230 = scmp.eq.s32.totalorder %s25, 0
    %p231 = por %p229, %p230
    %p232 = scmp.ne.s32.totalorder %s220, %s221
    %p233 = scmp.eq.s32.totalorder %s26, 5
    %p234 = por %p232, %p233
    %p236 = scmp.ne.s32.totalorder %s221, %s235
    %p237 = scmp.eq.s32.totalorder %s26, 0
    %p238 = por %p236, %p237
    %s240 = sadd.s32 %s239, 1
    %p243 = scmp.eq.s32.totalorder %s20, 5
    %p244 = scmp.ne.s32.totalorder %s239, %s241
    %p245 = scmp.eq.s32.totalorder %s20, 0
    %p246 = por %p244, %p245
    %p247 = scmp.ne.s32.totalorder %s239, %s241
    %p248 = scmp.eq.s32.totalorder %s25, 5
    %p249 = por %p247, %p248
    %p250 = scmp.ne.s32.totalorder %s241, %s242
    %p251 = scmp.eq.s32.totalorder %s25, 0
    %p252 = por %p250, %p251
    %p253 = scmp.ne.s32.totalorder %s241, %s242
    %p254 = scmp.eq.s32.totalorder %s26, 5
    %p255 = por %p253, %p254
    %p257 = scmp.ne.s32.totalorder %s242, %s256
    %p258 = scmp.eq.s32.totalorder %s26, 0
    %p259 = por %p257, %p258
    %s261 = sadd.s32 %s260, 1
    %p264 = scmp.eq.s32.totalorder %s20, 5
    %p265 = scmp.ne.s32.totalorder %s260, %s262
    %p266 = scmp.eq.s32.totalorder %s20, 0
    %p267 = por %p265, %p266
    %p268 = scmp.ne.s32.totalorder %s260, %s262
    %p269 = scmp.eq.s32.totalorder %s25, 5
    %p270 = por %p268, %p269
    %p271 = scmp.ne.s32.totalorder %s262, %s263
    %p272 = scmp.eq.s32.totalorder %s25, 0
    %p273 = por %p271, %p272
    %p274 = scmp.ne.s32.totalorder %s262, %s263
    %p275 = scmp.eq.s32.totalorder %s26, 5
    %p276 = por %p274, %p275
    %p278 = scmp.ne.s32.totalorder %s263, %s277
    %p279 = scmp.eq.s32.totalorder %s26, 0
    %p280 = por %p278, %p279
    %s282 = sadd.s32 %s281, 1
    %p285 = scmp.eq.s32.totalorder %s20, 5
    %p286 = scmp.ne.s32.totalorder %s281, %s283
    %p287 = scmp.eq.s32.totalorder %s20, 0
    %p288 = por %p286, %p287
    %p289 = scmp.ne.s32.totalorder %s281, %s283
    %p290 = scmp.eq.s32.totalorder %s25, 5
    %p291 = por %p289, %p290
    %p292 = scmp.ne.s32.totalorder %s283, %s284
    %p293 = scmp.eq.s32.totalorder %s25, 0
    %p294 = por %p292, %p293
    %p295 = scmp.ne.s32.totalorder %s283, %s284
    %p296 = scmp.eq.s32.totalorder %s26, 5
    %p297 = por %p295, %p296
    %p299 = scmp.ne.s32.totalorder %s284, %s298
    %p300 = scmp.eq.s32.totalorder %s26, 0
    %p301 = por %p299, %p300
    %s303 = sadd.s32 %s302, 1
    %p306 = scmp.eq.s32.totalorder %s20, 5
    %p307 = scmp.ne.s32.totalorder %s302, %s304
    %p308 = scmp.eq.s32.totalorder %s20, 0
    %p309 = por %p307, %p308
    %p310 = scmp.ne.s32.totalorder %s302, %s304
    %p311 = scmp.eq.s32.totalorder %s25, 5
    %p312 = por %p310, %p311
    %p313 = scmp.ne.s32.totalorder %s304, %s305
    %p314 = scmp.eq.s32.totalorder %s25, 0
    %p315 = por %p313, %p314
    %p316 = scmp.ne.s32.totalorder %s304, %s305
    %p317 = scmp.eq.s32.totalorder %s26, 5
    %p318 = por %p316, %p317
    %p320 = scmp.ne.s32.totalorder %s305, %s319
    %p321 = scmp.eq.s32.totalorder %s26, 0
    %p322 = por %p320, %p321
    %s324 = sadd.s32 %s323, 1
    %p327 = scmp.eq.s32.totalorder %s20, 5
    %p328 = scmp.ne.s32.totalorder %s323, %s325
    %p329 = scmp.eq.s32.totalorder %s20, 0
    %p330 = por %p328, %p329
    %p331 = scmp.ne.s32.totalorder %s323, %s325
    %p332 = scmp.eq.s32.totalorder %s25, 5
    %p333 = por %p331, %p332
    %p334 = scmp.ne.s32.totalorder %s325, %s326
    %p335 = scmp.eq.s32.totalorder %s25, 0
    %p336 = por %p334, %p335
    %p337 = scmp.ne.s32.totalorder %s325, %s326
    %p338 = scmp.eq.s32.totalorder %s26, 5
    %p339 = por %p337, %p338
    %p341 = scmp.ne.s32.totalorder %s326, %s340
    %p342 = scmp.eq.s32.totalorder %s26, 0
    %p343 = por %p341, %p342
    %p344 = scmp.eq.s32.totalorder %s27, 2
    %s345 = scalar_select %p344, %s28, 0
    %p346 = scmp.eq.s32.totalorder %s39, 2
    %s347 = scalar_select %p346, %s35, 0
    %s348 = ssub.s32 %s345, %s347
    %p349 = scmp.eq.s32.totalorder %s348, 0
    %s351 = sadd.s32 %s350, 1
    %s352 = scalar_select %p349, %s350, %s351
    %p355 = pneg %p349
    %p356 = scmp.eq.s32.totalorder %s20, 5
    %p357 = por %p355, %p356
    %p358 = scmp.ne.s32.totalorder %s350, %s353
    %p359 = scmp.eq.s32.totalorder %s20, 0
    %p360 = por %p358, %p359
    %p361 = scmp.ne.s32.totalorder %s350, %s353
    %p362 = scmp.eq.s32.totalorder %s25, 5
    %p363 = por %p361, %p362
    %p364 = scmp.ne.s32.totalorder %s353, %s354
    %p365 = scmp.eq.s32.totalorder %s25, 0
    %p366 = por %p364, %p365
    %p367 = scmp.ne.s32.totalorder %s353, %s354
    %p368 = scmp.eq.s32.totalorder %s26, 5
    %p369 = por %p367, %p368
    %p371 = scmp.ne.s32.totalorder %s354, %s370
    %p372 = scmp.eq.s32.totalorder %s26, 0
    %p373 = por %p371, %p372
    %p374 = scmp.le.s32.totalorder 1, %s20
    %p375 = scmp.lt.s32.totalorder %s20, 7
    %p376 = pnand %p374, %p375
    %p377 = pneg %p376
    // Predicated region
    $region9: #{up_causal2_pallas.1} parent=5 // pred_check
      _
    $region10: #{up_causal2_pallas.1} parent=5 // pred_check_branch
      %379 = sbr.rel (%p376) target = $region12
    $region11: #{up_causal2_pallas.1} parent=5 // pred_region
      %s380 = ssub.s32 %s20, 1
      // Predicated region
      $region13: #{up_causal2_pallas.1} parent=11 // pred_check
        %p381 = pneg %p105
      $region14: #{up_causal2_pallas.1} parent=11 // pred_check_branch
        %383 = sbr.rel (%p381) target = $region16
      $region15: #{up_causal2_pallas.1} parent=11 // pred_region
        _
      $region16: #{up_causal2_pallas.1} parent=11 // pred_fallthru
        _
      // Predicated region
      $region17: #{up_causal2_pallas.1} parent=11 // pred_check
        %p384 = pneg %p126
      $region18: #{up_causal2_pallas.1} parent=11 // pred_check_branch
        %386 = sbr.rel (%p384) target = $region20
      $region19: #{up_causal2_pallas.1} parent=11 // pred_region
        _
      $region20: #{up_causal2_pallas.1} parent=11 // pred_fallthru
        _
      // Predicated region
      $region21: #{up_causal2_pallas.1} parent=11 // pred_check
        %p387 = pneg %p147
      $region22: #{up_causal2_pallas.1} parent=11 // pred_check_branch
        %389 = sbr.rel (%p387) target = $region24
      $region23: #{up_causal2_pallas.1} parent=11 // pred_region
        _
      $region24: #{up_causal2_pallas.1} parent=11 // pred_fallthru
        _
      // Predicated region
      $region25: #{up_causal2_pallas.1} parent=11 // pred_check
        %p390 = pneg %p168
      $region26: #{up_causal2_pallas.1} parent=11 // pred_check_branch
        %392 = sbr.rel (%p390) target = $region28
      $region27: #{up_causal2_pallas.1} parent=11 // pred_region
        _
      $region28: #{up_causal2_pallas.1} parent=11 // pred_fallthru
        _
      // Predicated region
      $region29: #{up_causal2_pallas.1} parent=11 // pred_check
        %p393 = pneg %p189
      $region30: #{up_causal2_pallas.1} parent=11 // pred_check_branch
        %395 = sbr.rel (%p393) target = $region32
      $region31: #{up_causal2_pallas.1} parent=11 // pred_region
        _
      $region32: #{up_causal2_pallas.1} parent=11 // pred_fallthru
        _
      // Predicated region
      $region33: #{up_causal2_pallas.1} parent=11 // pred_check
        %p396 = pneg %p210
      $region34: #{up_causal2_pallas.1} parent=11 // pred_check_branch
        %398 = sbr.rel (%p396) target = $region36
      $region35: #{up_causal2_pallas.1} parent=11 // pred_region
        _
      $region36: #{up_causal2_pallas.1} parent=11 // pred_fallthru
        _
      // Predicated region
      $region37: #{up_causal2_pallas.1} parent=11 // pred_check
        %p399 = pneg %p231
      $region38: #{up_causal2_pallas.1} parent=11 // pred_check_branch
        %401 = sbr.rel (%p399) target = $region40
      $region39: #{up_causal2_pallas.1} parent=11 // pred_region
        _
      $region40: #{up_causal2_pallas.1} parent=11 // pred_fallthru
        _
      // Predicated region
      $region41: #{up_causal2_pallas.1} parent=11 // pred_check
        %p402 = pneg %p252
      $region42: #{up_causal2_pallas.1} parent=11 // pred_check_branch
        %404 = sbr.rel (%p402) target = $region44
      $region43: #{up_causal2_pallas.1} parent=11 // pred_region
        _
      $region44: #{up_causal2_pallas.1} parent=11 // pred_fallthru
        _
      // Predicated region
      $region45: #{up_causal2_pallas.1} parent=11 // pred_check
        %p405 = pneg %p273
      $region46: #{up_causal2_pallas.1} parent=11 // pred_check_branch
        %407 = sbr.rel (%p405) target = $region48
      $region47: #{up_causal2_pallas.1} parent=11 // pred_region
        _
      $region48: #{up_causal2_pallas.1} parent=11 // pred_fallthru
        _
      // Predicated region
      $region49: #{up_causal2_pallas.1} parent=11 // pred_check
        %p408 = pneg %p294
      $region50: #{up_causal2_pallas.1} parent=11 // pred_check_branch
        %410 = sbr.rel (%p408) target = $region52
      $region51: #{up_causal2_pallas.1} parent=11 // pred_region
        _
      $region52: #{up_causal2_pallas.1} parent=11 // pred_fallthru
        _
      // Predicated region
      $region53: #{up_causal2_pallas.1} parent=11 // pred_check
        %p411 = pneg %p315
      $region54: #{up_causal2_pallas.1} parent=11 // pred_check_branch
        %413 = sbr.rel (%p411) target = $region56
      $region55: #{up_causal2_pallas.1} parent=11 // pred_region
        _
      $region56: #{up_causal2_pallas.1} parent=11 // pred_fallthru
        _
      // Predicated region
      $region57: #{up_causal2_pallas.1} parent=11 // pred_check
        %p414 = pneg %p336
      $region58: #{up_causal2_pallas.1} parent=11 // pred_check_branch
        %416 = sbr.rel (%p414) target = $region60
      $region59: #{up_causal2_pallas.1} parent=11 // pred_region
        _
      $region60: #{up_causal2_pallas.1} parent=11 // pred_fallthru
        _
    $region12: #{up_causal2_pallas.1} parent=5 // pred_fallthru
      _
    %p417 = scmp.lt.s32.totalorder %s20, 6
    // Predicated region
    $region61: #{up_causal2_pallas.1} parent=5 // pred_check
      %p418 = pneg %p417
    $region62: #{up_causal2_pallas.1} parent=5 // pred_check_branch
      %420 = sbr.rel (%p418) target = $region64
    $region63: #{up_causal2_pallas.1} parent=5 // pred_region
      // Predicated region
      $region65: #{up_causal2_pallas.1} parent=63 // pred_check
        %p421 = pneg %p52
      $region66: #{up_causal2_pallas.1} parent=63 // pred_check_branch
        %423 = sbr.rel (%p421) target = $region68
      $region67: #{up_causal2_pallas.1} parent=63 // pred_region
        %p424 = scmp.lt.s32.totalorder %s28, 1
        %s425 = scalar_select %p424, %s28, 1
        %s426 = smul.addr %s425, 2
        %s427 = smul.addr %s426, 8
        %s428 = scalar_lea.vmem %s0, %s427
      $region68: #{up_causal2_pallas.1} parent=63 // pred_fallthru
        _
      // Predicated region
      $region69: #{up_causal2_pallas.1} parent=63 // pred_check
        %p429 = pneg %p78
      $region70: #{up_causal2_pallas.1} parent=63 // pred_check_branch
        %431 = sbr.rel (%p429) target = $region72
      $region71: #{up_causal2_pallas.1} parent=63 // pred_region
        %p432 = scmp.lt.s32.totalorder %s28, 1
        %s433 = scalar_select %p432, %s28, 1
        %s434 = smul.addr %s433, 2
        %s435 = smul.addr %s434, 8
        %s436 = scalar_lea.vmem %s1, %s435
      $region72: #{up_causal2_pallas.1} parent=63 // pred_fallthru
        _
    $region64: #{up_causal2_pallas.1} parent=5 // pred_fallthru
      _
    %p437 = scmp.le.s32.totalorder 1, %s20
    %p438 = scmp.lt.s32.totalorder %s20, 7
    %p439 = pnand %p437, %p438
    %p440 = pneg %p439
    // Predicated region
    $region73: #{up_causal2_pallas.1} parent=5 // pred_check
      _
    $region74: #{up_causal2_pallas.1} parent=5 // pred_check_branch
      %442 = sbr.rel (%p439) target = $region76
    $region75: #{up_causal2_pallas.1} parent=5 // pred_region
      %s443 = ssub.s32 %s20, 1
      %p444 = scmp.lt.s32.totalorder %s30, 1
      %s445 = scalar_select %p444, %s30, 1
      %s446 = smul.addr %s445, 2
      %s447 = smul.addr %s446, 8
      %s448 = scalar_lea.vmem %s0, %s447
      %p449 = pneg %p58
      %p450 = pneg %p55
      %p451 = scmp.lt.s32.totalorder %s30, 1
      %s452 = scalar_select %p451, %s30, 1
      %s453 = smul.addr %s452, 2
      %s454 = smul.addr %s453, 8
      %s455 = scalar_lea.vmem %s1, %s454
      %p456 = pneg %p84
      %p457 = pneg %p81
      %p458 = pneg %p105
      %p459 = pneg %p102
      %p460 = pneg %p126
      %p461 = pneg %p123
      %p462 = pneg %p147
      %p463 = pneg %p144
      %p464 = pneg %p168
      %p465 = pneg %p165
      %p466 = pneg %p189
      %p467 = pneg %p186
      %p468 = pneg %p210
      %p469 = pneg %p207
      %p470 = pneg %p231
      %p471 = pneg %p228
      %p472 = pneg %p252
      %p473 = pneg %p249
      %p474 = pneg %p273
      %p475 = pneg %p270
      %p476 = pneg %p294
      %p477 = pneg %p291
      %p478 = pneg %p315
      %p479 = pneg %p312
      %p480 = pneg %p336
      %p481 = pneg %p333
      %p482 = pneg %p366
      %p483 = pneg %p363
      %p484 = scmp.eq.s32.totalorder %s29, 2
      %s485 = scalar_select %p484, %s30, 0
      %p486 = scmp.lt.s32.totalorder %s485, 1
      %s487 = scalar_select %p486, %s485, 1
      %s488 = smul.addr %s487, 2
      %s489 = smul.addr %s488, 8
      %s490 = scalar_lea.vmem %s14, %s489
      %p491 = scmp.lt.s32.totalorder %s30, 1
      %s492 = scalar_select %p491, %s30, 1
      %s493 = smul.addr %s492, 2
      %s494 = smul.addr %s493, 8
      %s495 = scalar_lea.vmem %s0, %s494
      %p496 = scmp.lt.s32.totalorder %s30, 1
      %s497 = scalar_select %p496, %s30, 1
      %s498 = smul.addr %s497, 2
      %s499 = smul.addr %s498, 8
      %s500 = scalar_lea.vmem %s1, %s499
      %p501 = scmp.eq.s32.totalorder %s29, 2
      %s502 = scalar_select %p501, %s30, 0
      %p503 = scmp.lt.s32.totalorder %s502, 1
      %s504 = scalar_select %p503, %s502, 1
      %s505 = smul.addr %s504, 2
      %s506 = smul.addr %s505, 8
      %s507 = scalar_lea.vmem %s14, %s506
      %p508 = scmp.eq.s32.totalorder %s29, 2
      %s509 = scalar_select %p508, %s30, 0
      %p510 = scmp.eq.s32.totalorder %s29, 0
      %p511 = scmp.eq.s32.totalorder %s30, 0
      %p512 = pnand %p510, %p511
      %p513 = pneg %p512
      // Predicated region
      $region77: #{up_causal2_pallas.1} parent=75 // pred_check
        _
      $region78: #{up_causal2_pallas.1} parent=75 // pred_check_branch
        %515 = sbr.rel (%p512) target = $region80
      $region79: #{up_causal2_pallas.1} parent=75 // pred_region
        %vm516 = vcmask 58368
        %517 = vst.msk [vmem:[#allocation2] sm:$0x3] %vm516, 0.0
        %518 = vst.msk [vmem:[#allocation3] sm:$0x3] %vm516, 0.0
      $region80: #{up_causal2_pallas.1} parent=75 // pred_fallthru
        _
      %v519 = vlaneseq
      %v520 = vshrl.u32 %v519, 7
      %v521 = vadd.s32 %v520, 8
      %vm522 = vcmp.ge.s32.totalorder %v520, 0
      %vm523 = vcmp.ge.s32.totalorder %v521, 0
      %vm524 = vcmp.lt.s32.totalorder %v520, 16
      %vm525 = vcmp.lt.s32.totalorder %v521, 16
      %vm526 = vmand %vm522, %vm524
      %vm527 = vmand %vm523, %vm525
      %vm528 = vcmp.lt.s32.totalorder %v520, 0
      %v529 = vsub.s32 0, %v520
      %v530 = vsel %vm528, %v529, %v520
      %v531 = vshrl.u32 %v530, 1
      %v532 = vand.u32 %v530, 1
      %v533 = vsub.s32 0, %v532
      %v534 = vsel %vm528, %v533, %v532
      %vm535 = vcmp.lt.s32.totalorder %v521, 0
      %v536 = vsub.s32 0, %v521
      %v537 = vsel %vm535, %v536, %v521
      %v538 = vshrl.u32 %v537, 1
      %v539 = vand.u32 %v537, 1
      %v540 = vsub.s32 0, %v539
      %v541 = vsel %vm535, %v540, %v539
      %vm542 = vcmp.ne.s32.totalorder %v534, 0
      %vm543 = vcmp.ne.s32.totalorder %v541, 0
      %vm544 = vcmp.lt.s32.totalorder %v534, 0
      %vm545 = vcmp.lt.s32.totalorder %v541, 0
      %vm546 = vmand %vm544, %vm542
      %vm547 = vmand %vm545, %vm543
      %v548 = vadd.s32 %v534, 2
      %v549 = vadd.s32 %v541, 2
      %v550 = vsel %vm546, %v548, %v534
      %v551 = vsel %vm547, %v549, %v541
      %vm552 = vcmp.eq.s32.totalorder %v550, 0
      %vm553 = vcmp.eq.s32.totalorder %v551, 0
      %v554 = vld [vmem:[%s495] sm:$0xff]
      %v555 = vld [vmem:[%s495 + $0x8] sm:$0xff]
      %v556 = vld [vmem:[%s500] sm:$0xff]
      %v557 = vld [vmem:[%s500 + $0x8] sm:$0xff]
      %v558 = vld [vmem:[%s2] sm:$0xf]
      %vm559 = vcmask 31744
      %v561 = vsel %vm559, %v554, 0
      %v564 = vsel %vm559, %v555, 0
      %vm566 = vcmask 1043456
      %v568 = vsel %vm566, %v558, 0
      %570 = vmatprep.subr.mxu0 0.0
      %571 = vmatpush1.msra.mxu0 0.0
      %572 = vmatprep.subr.mxu0 0.0
      %573 = vmatpush1.msra.mxu0 0.0
      %574 = vmatprep.subr.mxu0 0.0
      %575 = vmatpush1.msra.mxu0 0.0
      %576 = vmatprep.subr.mxu0 0.0
      %577 = vmatpush1.msra.mxu0 0.0
      %578 = vmatprep.subr.mxu0 0.0
      %579 = vmatpush1.msra.mxu0 0.0
      %580 = vmatprep.subr.mxu0 0.0
      %581 = vmatpush1.msra.mxu0 0.0
      %582 = vmatprep.subr.mxu0 0.0
      %583 = vmatpush1.msra.mxu0 0.0
      %584 = vmatprep.subr.mxu0 0.0
      %585 = vmatpush1.msra.mxu0 0.0
      %586 = vmatprep.subr.mxu0 0.0
      %587 = vmatpush1.msra.mxu0 0.0
      %588 = vmatprep.subr.mxu0 0.0
      %589 = vmatpush1.msra.mxu0 0.0
      %590 = vmatprep.subr.mxu0 0.0
      %591 = vmatpush1.msra.mxu0 0.0
      %592 = vmatprep.subr.mxu0 0.0
      %593 = vmatpush1.msra.mxu0 0.0
      %594 = vmatprep.subr.mxu0 0.0
      %595 = vmatpush1.msra.mxu0 0.0
      %596 = vmatprep.subr.mxu0 0.0
      %597 = vmatpush1.msra.mxu0 0.0
      %598 = vmatprep.subr.mxu0 0.0
      %599 = vmatpush1.msra.mxu0 0.0
      %600 = vmatprep.subr.mxu0 0.0
      %601 = vmatpush1.msra.mxu0 %v568
      %602 = vmatprep.subr.mxu0 0.0
      %603 = vmatpush2.msra.mxu0 0.0
      %604 = vmatprep.subr.mxu0 0.0
      %605 = vmatpush2.msra.mxu0 0.0
      %606 = vmatprep.subr.mxu0 0.0
      %607 = vmatpush2.msra.mxu0 0.0
      %608 = vmatprep.subr.mxu0 0.0
      %609 = vmatpush2.msra.mxu0 0.0
      %610 = vmatprep.subr.mxu0 0.0
      %611 = vmatpush2.msra.mxu0 0.0
      %612 = vmatprep.subr.mxu0 0.0
      %613 = vmatpush2.msra.mxu0 0.0
      %614 = vmatprep.subr.mxu0 0.0
      %615 = vmatpush2.msra.mxu0 0.0
      %616 = vmatprep.subr.mxu0 0.0
      %617 = vmatpush2.msra.mxu0 0.0
      %618 = vmatprep.subr.mxu0 0.0
      %619 = vmatpush2.msra.mxu0 0.0
      %620 = vmatprep.subr.mxu0 0.0
      %621 = vmatpush2.msra.mxu0 0.0
      %622 = vmatprep.subr.mxu0 0.0
      %623 = vmatpush2.msra.mxu0 0.0
      %624 = vmatprep.subr.mxu0 0.0
      %625 = vmatpush2.msra.mxu0 0.0
      %626 = vmatprep.subr.mxu0 0.0
      %627 = vmatpush2.msra.mxu0 0.0
      %628 = vmatprep.subr.mxu0 0.0
      %629 = vmatpush2.msra.mxu0 0.0
      %630 = vmatprep.subr.mxu0 0.0
      %631 = vmatpush2.msra.mxu0 0.0
      %632 = vmatprep.subr.mxu0 0.0
      %633 = vmatpush2.msra.mxu0 0.0
      %634 = vmatprep.mubr.f32.mxu0 0.0
      %635 = vmatmul.mubr.f32.gmra.mxu0 %v561
      %v636 = vpop.f32.mrf.mxu0
      %v637 = vadd.f32 0.0, %v636
      %v638 = vpop.f32.mrf.mxu0
      %639 = vmatprep.mubr.f32.mxu0 0.0
      %640 = vmatmul.mubr.f32.gmra.mxu0 %v564
      %v641 = vpop.f32.mrf.mxu0
      %v642 = vadd.f32 0.0, %v641
      %v643 = vpop.f32.mrf.mxu0
      %644 = vdwg.mxu0
      %v645 = vld [vmem:[%s3] sm:$0xf]
      %v647 = vsel %vm566, %v645, 0
      %649 = vmatprep.subr.mxu0 0.0
      %650 = vmatpush1.msra.mxu0 0.0
      %651 = vmatprep.subr.mxu0 0.0
      %652 = vmatpush1.msra.mxu0 0.0
      %653 = vmatprep.subr.mxu0 0.0
      %654 = vmatpush1.msra.mxu0 0.0
      %655 = vmatprep.subr.mxu0 0.0
      %656 = vmatpush1.msra.mxu0 0.0
      %657 = vmatprep.subr.mxu0 0.0
      %658 = vmatpush1.msra.mxu0 0.0
      %659 = vmatprep.subr.mxu0 0.0
      %660 = vmatpush1.msra.mxu0 0.0
      %661 = vmatprep.subr.mxu0 0.0
      %662 = vmatpush1.msra.mxu0 0.0
      %663 = vmatprep.subr.mxu0 0.0
      %664 = vmatpush1.msra.mxu0 0.0
      %665 = vmatprep.subr.mxu0 0.0
      %666 = vmatpush1.msra.mxu0 0.0
      %667 = vmatprep.subr.mxu0 0.0
      %668 = vmatpush1.msra.mxu0 0.0
      %669 = vmatprep.subr.mxu0 0.0
      %670 = vmatpush1.msra.mxu0 0.0
      %671 = vmatprep.subr.mxu0 0.0
      %672 = vmatpush1.msra.mxu0 0.0
      %673 = vmatprep.subr.mxu0 0.0
      %674 = vmatpush1.msra.mxu0 0.0
      %675 = vmatprep.subr.mxu0 0.0
      %676 = vmatpush1.msra.mxu0 0.0
      %677 = vmatprep.subr.mxu0 0.0
      %678 = vmatpush1.msra.mxu0 0.0
      %679 = vmatprep.subr.mxu0 0.0
      %680 = vmatpush1.msra.mxu0 %v647
      %681 = vmatprep.subr.mxu0 0.0
      %682 = vmatpush2.msra.mxu0 0.0
      %683 = vmatprep.subr.mxu0 0.0
      %684 = vmatpush2.msra.mxu0 0.0
      %685 = vmatprep.subr.mxu0 0.0
      %686 = vmatpush2.msra.mxu0 0.0
      %687 = vmatprep.subr.mxu0 0.0
      %688 = vmatpush2.msra.mxu0 0.0
      %689 = vmatprep.subr.mxu0 0.0
      %690 = vmatpush2.msra.mxu0 0.0
      %691 = vmatprep.subr.mxu0 0.0
      %692 = vmatpush2.msra.mxu0 0.0
      %693 = vmatprep.subr.mxu0 0.0
      %694 = vmatpush2.msra.mxu0 0.0
      %695 = vmatprep.subr.mxu0 0.0
      %696 = vmatpush2.msra.mxu0 0.0
      %697 = vmatprep.subr.mxu0 0.0
      %698 = vmatpush2.msra.mxu0 0.0
      %699 = vmatprep.subr.mxu0 0.0
      %700 = vmatpush2.msra.mxu0 0.0
      %701 = vmatprep.subr.mxu0 0.0
      %702 = vmatpush2.msra.mxu0 0.0
      %703 = vmatprep.subr.mxu0 0.0
      %704 = vmatpush2.msra.mxu0 0.0
      %705 = vmatprep.subr.mxu0 0.0
      %706 = vmatpush2.msra.mxu0 0.0
      %707 = vmatprep.subr.mxu0 0.0
      %708 = vmatpush2.msra.mxu0 0.0
      %709 = vmatprep.subr.mxu0 0.0
      %710 = vmatpush2.msra.mxu0 0.0
      %711 = vmatprep.subr.mxu0 0.0
      %712 = vmatpush2.msra.mxu0 0.0
      %713 = vmatprep.mubr.f32.mxu0 0.0
      %714 = vmatmul.mubr.f32.gmra.mxu0 %v561
      %v715 = vpop.f32.mrf.mxu0
      %v716 = vadd.f32 0.0, %v715
      %v717 = vpop.f32.mrf.mxu0
      %718 = vmatprep.mubr.f32.mxu0 0.0
      %719 = vmatmul.mubr.f32.gmra.mxu0 %v564
      %v720 = vpop.f32.mrf.mxu0
      %v721 = vadd.f32 0.0, %v720
      %v722 = vpop.f32.mrf.mxu0
      %723 = vdwg.mxu0
      %v724 = vsel %vm552, 1, 0
      %v725 = vsel %vm553, 1, 0
      %vm726 = vcmp.eq.s32.totalorder %v724, 1
      %vm727 = vcmp.eq.s32.totalorder %v725, 1
      %v728 = vsel %vm726, %v637, %v716
      %v729 = vsel %vm727, %v642, %v721
      %v730 = vld [vmem:[%s4] sm:$0x1]
      %v731 = vsel %vm526, 1, 0
      %v732 = vsel %vm527, 1, 0
      %vm733 = vcmp.eq.s32.totalorder %v731, 1
      %vm734 = vcmp.eq.s32.totalorder %v732, 1
      %v736 = vlaneseq
      %v737 = vshrl.u32 %v736, 7
      %v738 = vsub.s32 0, %v737
      %v739 = vrot.slane %v730, %v738
      %v741 = vsel %vm733, %v739, 0.0
      %v742 = vsel %vm734, %v739, 0.0
      %v743 = vadd.f32 %v728, %v741
      %v744 = vadd.f32 %v729, %v742
      %v745 = vld [vmem:[%s7] sm:$0x1]
      %vm748 = vcmask 1041408
      %v749 = vrot.slane %v743, 6
      %v750 = vrot.slane %v744, 6
      %v751 = vsel %vm748, %v749, %v750
      %v753 = vsel %vm748, 0.0, %v749
      %v754 = vld [vmem:[%s5] sm:$0xf]
      %v756 = vsel %vm559, %v753, 0
      %v758 = vsel %vm559, %v751, 0
      %v761 = vsel %vm566, %v754, 0
      %763 = vmatprep.subr.mxu0 0.0
      %764 = vmatpush1.msra.mxu0 0.0
      %765 = vmatprep.subr.mxu0 0.0
      %766 = vmatpush1.msra.mxu0 0.0
      %767 = vmatprep.subr.mxu0 0.0
      %768 = vmatpush1.msra.mxu0 0.0
      %769 = vmatprep.subr.mxu0 0.0
      %770 = vmatpush1.msra.mxu0 0.0
      %771 = vmatprep.subr.mxu0 0.0
      %772 = vmatpush1.msra.mxu0 0.0
      %773 = vmatprep.subr.mxu0 0.0
      %774 = vmatpush1.msra.mxu0 0.0
      %775 = vmatprep.subr.mxu0 0.0
      %776 = vmatpush1.msra.mxu0 0.0
      %777 = vmatprep.subr.mxu0 0.0
      %778 = vmatpush1.msra.mxu0 0.0
      %779 = vmatprep.subr.mxu0 0.0
      %780 = vmatpush1.msra.mxu0 0.0
      %781 = vmatprep.subr.mxu0 0.0
      %782 = vmatpush1.msra.mxu0 0.0
      %783 = vmatprep.subr.mxu0 0.0
      %784 = vmatpush1.msra.mxu0 0.0
      %785 = vmatprep.subr.mxu0 0.0
      %786 = vmatpush1.msra.mxu0 0.0
      %787 = vmatprep.subr.mxu0 0.0
      %788 = vmatpush1.msra.mxu0 0.0
      %789 = vmatprep.subr.mxu0 0.0
      %790 = vmatpush1.msra.mxu0 0.0
      %791 = vmatprep.subr.mxu0 0.0
      %792 = vmatpush1.msra.mxu0 0.0
      %793 = vmatprep.subr.mxu0 0.0
      %794 = vmatpush1.msra.mxu0 %v761
      %795 = vmatprep.subr.mxu0 0.0
      %796 = vmatpush2.msra.mxu0 0.0
      %797 = vmatprep.subr.mxu0 0.0
      %798 = vmatpush2.msra.mxu0 0.0
      %799 = vmatprep.subr.mxu0 0.0
      %800 = vmatpush2.msra.mxu0 0.0
      %801 = vmatprep.subr.mxu0 0.0
      %802 = vmatpush2.msra.mxu0 0.0
      %803 = vmatprep.subr.mxu0 0.0
      %804 = vmatpush2.msra.mxu0 0.0
      %805 = vmatprep.subr.mxu0 0.0
      %806 = vmatpush2.msra.mxu0 0.0
      %807 = vmatprep.subr.mxu0 0.0
      %808 = vmatpush2.msra.mxu0 0.0
      %809 = vmatprep.subr.mxu0 0.0
      %810 = vmatpush2.msra.mxu0 0.0
      %811 = vmatprep.subr.mxu0 0.0
      %812 = vmatpush2.msra.mxu0 0.0
      %813 = vmatprep.subr.mxu0 0.0
      %814 = vmatpush2.msra.mxu0 0.0
      %815 = vmatprep.subr.mxu0 0.0
      %816 = vmatpush2.msra.mxu0 0.0
      %817 = vmatprep.subr.mxu0 0.0
      %818 = vmatpush2.msra.mxu0 0.0
      %819 = vmatprep.subr.mxu0 0.0
      %820 = vmatpush2.msra.mxu0 0.0
      %821 = vmatprep.subr.mxu0 0.0
      %822 = vmatpush2.msra.mxu0 0.0
      %823 = vmatprep.subr.mxu0 0.0
      %824 = vmatpush2.msra.mxu0 0.0
      %825 = vmatprep.subr.mxu0 0.0
      %826 = vmatpush2.msra.mxu0 0.0
      %827 = vmatprep.mubr.f32.mxu0 0.0
      %828 = vmatmul.mubr.f32.gmra.mxu0 %v756
      %v829 = vpop.f32.mrf.mxu0
      %v830 = vadd.f32 0.0, %v829
      %v831 = vpop.f32.mrf.mxu0
      %832 = vmatprep.mubr.f32.mxu0 0.0
      %833 = vmatmul.mubr.f32.gmra.mxu0 %v758
      %v834 = vpop.f32.mrf.mxu0
      %v835 = vadd.f32 0.0, %v834
      %v836 = vpop.f32.mrf.mxu0
      %837 = vdwg.mxu0
      %v839 = vlaneseq
      %v840 = vshrl.u32 %v839, 7
      %v841 = vsub.s32 0, %v840
      %v842 = vrot.slane %v745, %v841
      %v844 = vadd.f32 %v842, %v830
      %v845 = vadd.f32 %v842, %v835
      %vm846 = vcmask 1040384
      %v847 = vrot.slane %v743, 7
      %v848 = vrot.slane %v744, 7
      %v849 = vsel %vm846, %v847, %v848
      %v851 = vsel %vm846, 0.0, %v847
      %s852 = scalar_lea.vmem %s5, 4
      %v853 = vld [vmem:[%s852] sm:$0xf]
      %v855 = vsel %vm559, %v851, 0
      %v857 = vsel %vm559, %v849, 0
      %v860 = vsel %vm566, %v853, 0
      %862 = vmatprep.subr.mxu0 0.0
      %863 = vmatpush1.msra.mxu0 0.0
      %864 = vmatprep.subr.mxu0 0.0
      %865 = vmatpush1.msra.mxu0 0.0
      %866 = vmatprep.subr.mxu0 0.0
      %867 = vmatpush1.msra.mxu0 0.0
      %868 = vmatprep.subr.mxu0 0.0
      %869 = vmatpush1.msra.mxu0 0.0
      %870 = vmatprep.subr.mxu0 0.0
      %871 = vmatpush1.msra.mxu0 0.0
      %872 = vmatprep.subr.mxu0 0.0
      %873 = vmatpush1.msra.mxu0 0.0
      %874 = vmatprep.subr.mxu0 0.0
      %875 = vmatpush1.msra.mxu0 0.0
      %876 = vmatprep.subr.mxu0 0.0
      %877 = vmatpush1.msra.mxu0 0.0
      %878 = vmatprep.subr.mxu0 0.0
      %879 = vmatpush1.msra.mxu0 0.0
      %880 = vmatprep.subr.mxu0 0.0
      %881 = vmatpush1.msra.mxu0 0.0
      %882 = vmatprep.subr.mxu0 0.0
      %883 = vmatpush1.msra.mxu0 0.0
      %884 = vmatprep.subr.mxu0 0.0
      %885 = vmatpush1.msra.mxu0 0.0
      %886 = vmatprep.subr.mxu0 0.0
      %887 = vmatpush1.msra.mxu0 0.0
      %888 = vmatprep.subr.mxu0 0.0
      %889 = vmatpush1.msra.mxu0 0.0
      %890 = vmatprep.subr.mxu0 0.0
      %891 = vmatpush1.msra.mxu0 0.0
      %892 = vmatprep.subr.mxu0 0.0
      %893 = vmatpush1.msra.mxu0 %v860
      %894 = vmatprep.subr.mxu0 0.0
      %895 = vmatpush2.msra.mxu0 0.0
      %896 = vmatprep.subr.mxu0 0.0
      %897 = vmatpush2.msra.mxu0 0.0
      %898 = vmatprep.subr.mxu0 0.0
      %899 = vmatpush2.msra.mxu0 0.0
      %900 = vmatprep.subr.mxu0 0.0
      %901 = vmatpush2.msra.mxu0 0.0
      %902 = vmatprep.subr.mxu0 0.0
      %903 = vmatpush2.msra.mxu0 0.0
      %904 = vmatprep.subr.mxu0 0.0
      %905 = vmatpush2.msra.mxu0 0.0
      %906 = vmatprep.subr.mxu0 0.0
      %907 = vmatpush2.msra.mxu0 0.0
      %908 = vmatprep.subr.mxu0 0.0
      %909 = vmatpush2.msra.mxu0 0.0
      %910 = vmatprep.subr.mxu0 0.0
      %911 = vmatpush2.msra.mxu0 0.0
      %912 = vmatprep.subr.mxu0 0.0
      %913 = vmatpush2.msra.mxu0 0.0
      %914 = vmatprep.subr.mxu0 0.0
      %915 = vmatpush2.msra.mxu0 0.0
      %916 = vmatprep.subr.mxu0 0.0
      %917 = vmatpush2.msra.mxu0 0.0
      %918 = vmatprep.subr.mxu0 0.0
      %919 = vmatpush2.msra.mxu0 0.0
      %920 = vmatprep.subr.mxu0 0.0
      %921 = vmatpush2.msra.mxu0 0.0
      %922 = vmatprep.subr.mxu0 0.0
      %923 = vmatpush2.msra.mxu0 0.0
      %924 = vmatprep.subr.mxu0 0.0
      %925 = vmatpush2.msra.mxu0 0.0
      %926 = vmatprep.mubr.f32.mxu0 0.0
      %927 = vmatmul.mubr.f32.gmra.mxu0 %v855
      %v928 = vpop.f32.mrf.mxu0
      %v929 = vadd.f32 0.0, %v928
      %v930 = vpop.f32.mrf.mxu0
      %931 = vmatprep.mubr.f32.mxu0 0.0
      %932 = vmatmul.mubr.f32.gmra.mxu0 %v857
      %v933 = vpop.f32.mrf.mxu0
      %v934 = vadd.f32 0.0, %v933
      %v935 = vpop.f32.mrf.mxu0
      %936 = vdwg.mxu0
      %v937 = vadd.f32 %v844, %v929
      %v938 = vadd.f32 %v845, %v934
      %s939 = scalar_lea.vmem %s5, 8
      %v940 = vld [vmem:[%s939] sm:$0xf]
      %v941 = vsel %vm559, %v743, 0
      %v943 = vsel %vm559, %v744, 0
      %v946 = vsel %vm566, %v940, 0
      %948 = vmatprep.subr.mxu0 0.0
      %949 = vmatpush1.msra.mxu0 0.0
      %950 = vmatprep.subr.mxu0 0.0
      %951 = vmatpush1.msra.mxu0 0.0
      %952 = vmatprep.subr.mxu0 0.0
      %953 = vmatpush1.msra.mxu0 0.0
      %954 = vmatprep.subr.mxu0 0.0
      %955 = vmatpush1.msra.mxu0 0.0
      %956 = vmatprep.subr.mxu0 0.0
      %957 = vmatpush1.msra.mxu0 0.0
      %958 = vmatprep.subr.mxu0 0.0
      %959 = vmatpush1.msra.mxu0 0.0
      %960 = vmatprep.subr.mxu0 0.0
      %961 = vmatpush1.msra.mxu0 0.0
      %962 = vmatprep.subr.mxu0 0.0
      %963 = vmatpush1.msra.mxu0 0.0
      %964 = vmatprep.subr.mxu0 0.0
      %965 = vmatpush1.msra.mxu0 0.0
      %966 = vmatprep.subr.mxu0 0.0
      %967 = vmatpush1.msra.mxu0 0.0
      %968 = vmatprep.subr.mxu0 0.0
      %969 = vmatpush1.msra.mxu0 0.0
      %970 = vmatprep.subr.mxu0 0.0
      %971 = vmatpush1.msra.mxu0 0.0
      %972 = vmatprep.subr.mxu0 0.0
      %973 = vmatpush1.msra.mxu0 0.0
      %974 = vmatprep.subr.mxu0 0.0
      %975 = vmatpush1.msra.mxu0 0.0
      %976 = vmatprep.subr.mxu0 0.0
      %977 = vmatpush1.msra.mxu0 0.0
      %978 = vmatprep.subr.mxu0 0.0
      %979 = vmatpush1.msra.mxu0 %v946
      %980 = vmatprep.subr.mxu0 0.0
      %981 = vmatpush2.msra.mxu0 0.0
      %982 = vmatprep.subr.mxu0 0.0
      %983 = vmatpush2.msra.mxu0 0.0
      %984 = vmatprep.subr.mxu0 0.0
      %985 = vmatpush2.msra.mxu0 0.0
      %986 = vmatprep.subr.mxu0 0.0
      %987 = vmatpush2.msra.mxu0 0.0
      %988 = vmatprep.subr.mxu0 0.0
      %989 = vmatpush2.msra.mxu0 0.0
      %990 = vmatprep.subr.mxu0 0.0
      %991 = vmatpush2.msra.mxu0 0.0
      %992 = vmatprep.subr.mxu0 0.0
      %993 = vmatpush2.msra.mxu0 0.0
      %994 = vmatprep.subr.mxu0 0.0
      %995 = vmatpush2.msra.mxu0 0.0
      %996 = vmatprep.subr.mxu0 0.0
      %997 = vmatpush2.msra.mxu0 0.0
      %998 = vmatprep.subr.mxu0 0.0
      %999 = vmatpush2.msra.mxu0 0.0
      %1000 = vmatprep.subr.mxu0 0.0
      %1001 = vmatpush2.msra.mxu0 0.0
      %1002 = vmatprep.subr.mxu0 0.0
      %1003 = vmatpush2.msra.mxu0 0.0
      %1004 = vmatprep.subr.mxu0 0.0
      %1005 = vmatpush2.msra.mxu0 0.0
      %1006 = vmatprep.subr.mxu0 0.0
      %1007 = vmatpush2.msra.mxu0 0.0
      %1008 = vmatprep.subr.mxu0 0.0
      %1009 = vmatpush2.msra.mxu0 0.0
      %1010 = vmatprep.subr.mxu0 0.0
      %1011 = vmatpush2.msra.mxu0 0.0
      %1012 = vmatprep.mubr.f32.mxu0 0.0
      %1013 = vmatmul.mubr.f32.gmra.mxu0 %v941
      %v1014 = vpop.f32.mrf.mxu0
      %v1015 = vadd.f32 0.0, %v1014
      %v1016 = vpop.f32.mrf.mxu0
      %1017 = vmatprep.mubr.f32.mxu0 0.0
      %1018 = vmatmul.mubr.f32.gmra.mxu0 %v943
      %v1019 = vpop.f32.mrf.mxu0
      %v1020 = vadd.f32 0.0, %v1019
      %v1021 = vpop.f32.mrf.mxu0
      %1022 = vdwg.mxu0
      %v1023 = vadd.f32 %v937, %v1015
      %v1024 = vadd.f32 %v938, %v1020
      %v1027 = vrot.slane %v556, 6
      %v1028 = vrot.slane %v557, 6
      %v1029 = vsel %vm748, %v1027, %v1028
      %v1031 = vsel %vm748, 0.0, %v1027
      %v1032 = vld [vmem:[%s6] sm:$0x3]
      %vm1033 = vcmask 15360
      %v1035 = vsel %vm1033, %v1031, 0
      %v1037 = vsel %vm1033, %v1029, 0
      %v1040 = vsel %vm748, %v1032, 0
      %1042 = vmatprep.subr.mxu0 0.0
      %1043 = vmatpush1.msra.mxu0 0.0
      %1044 = vmatprep.subr.mxu0 0.0
      %1045 = vmatpush1.msra.mxu0 0.0
      %1046 = vmatprep.subr.mxu0 0.0
      %1047 = vmatpush1.msra.mxu0 0.0
      %1048 = vmatprep.subr.mxu0 0.0
      %1049 = vmatpush1.msra.mxu0 0.0
      %1050 = vmatprep.subr.mxu0 0.0
      %1051 = vmatpush1.msra.mxu0 0.0
      %1052 = vmatprep.subr.mxu0 0.0
      %1053 = vmatpush1.msra.mxu0 0.0
      %1054 = vmatprep.subr.mxu0 0.0
      %1055 = vmatpush1.msra.mxu0 0.0
      %1056 = vmatprep.subr.mxu0 0.0
      %1057 = vmatpush1.msra.mxu0 0.0
      %1058 = vmatprep.subr.mxu0 0.0
      %1059 = vmatpush1.msra.mxu0 0.0
      %1060 = vmatprep.subr.mxu0 0.0
      %1061 = vmatpush1.msra.mxu0 0.0
      %1062 = vmatprep.subr.mxu0 0.0
      %1063 = vmatpush1.msra.mxu0 0.0
      %1064 = vmatprep.subr.mxu0 0.0
      %1065 = vmatpush1.msra.mxu0 0.0
      %1066 = vmatprep.subr.mxu0 0.0
      %1067 = vmatpush1.msra.mxu0 0.0
      %1068 = vmatprep.subr.mxu0 0.0
      %1069 = vmatpush1.msra.mxu0 0.0
      %1070 = vmatprep.subr.mxu0 0.0
      %1071 = vmatpush1.msra.mxu0 0.0
      %1072 = vmatprep.subr.mxu0 0.0
      %1073 = vmatpush1.msra.mxu0 %v1040
      %1074 = vmatprep.subr.mxu0 0.0
      %1075 = vmatpush2.msra.mxu0 0.0
      %1076 = vmatprep.subr.mxu0 0.0
      %1077 = vmatpush2.msra.mxu0 0.0
      %1078 = vmatprep.subr.mxu0 0.0
      %1079 = vmatpush2.msra.mxu0 0.0
      %1080 = vmatprep.subr.mxu0 0.0
      %1081 = vmatpush2.msra.mxu0 0.0
      %1082 = vmatprep.subr.mxu0 0.0
      %1083 = vmatpush2.msra.mxu0 0.0
      %1084 = vmatprep.subr.mxu0 0.0
      %1085 = vmatpush2.msra.mxu0 0.0
      %1086 = vmatprep.subr.mxu0 0.0
      %1087 = vmatpush2.msra.mxu0 0.0
      %1088 = vmatprep.subr.mxu0 0.0
      %1089 = vmatpush2.msra.mxu0 0.0
      %1090 = vmatprep.subr.mxu0 0.0
      %1091 = vmatpush2.msra.mxu0 0.0
      %1092 = vmatprep.subr.mxu0 0.0
      %1093 = vmatpush2.msra.mxu0 0.0
      %1094 = vmatprep.subr.mxu0 0.0
      %1095 = vmatpush2.msra.mxu0 0.0
      %1096 = vmatprep.subr.mxu0 0.0
      %1097 = vmatpush2.msra.mxu0 0.0
      %1098 = vmatprep.subr.mxu0 0.0
      %1099 = vmatpush2.msra.mxu0 0.0
      %1100 = vmatprep.subr.mxu0 0.0
      %1101 = vmatpush2.msra.mxu0 0.0
      %1102 = vmatprep.subr.mxu0 0.0
      %1103 = vmatpush2.msra.mxu0 0.0
      %1104 = vmatprep.subr.mxu0 0.0
      %1105 = vmatpush2.msra.mxu0 0.0
      %1106 = vmatprep.mubr.f32.mxu0 0.0
      %1107 = vmatmul.mubr.f32.gmra.mxu0 %v1035
      %v1108 = vpop.f32.mrf.mxu0
      %v1109 = vadd.f32 0.0, %v1108
      %v1110 = vpop.f32.mrf.mxu0
      %1111 = vmatprep.mubr.f32.mxu0 0.0
      %1112 = vmatmul.mubr.f32.gmra.mxu0 %v1037
      %v1113 = vpop.f32.mrf.mxu0
      %v1114 = vadd.f32 0.0, %v1113
      %v1115 = vpop.f32.mrf.mxu0
      %1116 = vdwg.mxu0
      %v1117 = vadd.f32 %v1023, %v1109
      %v1118 = vadd.f32 %v1024, %v1114
      %v1119 = vrot.slane %v556, 7
      %v1120 = vrot.slane %v557, 7
      %v1121 = vsel %vm846, %v1119, %v1120
      %v1123 = vsel %vm846, 0.0, %v1119
      %s1124 = scalar_lea.vmem %s6, 2
      %v1125 = vld [vmem:[%s1124] sm:$0x3]
      %v1127 = vsel %vm1033, %v1123, 0
      %v1129 = vsel %vm1033, %v1121, 0
      %v1132 = vsel %vm748, %v1125, 0
      %1134 = vmatprep.subr.mxu0 0.0
      %1135 = vmatpush1.msra.mxu0 0.0
      %1136 = vmatprep.subr.mxu0 0.0
      %1137 = vmatpush1.msra.mxu0 0.0
      %1138 = vmatprep.subr.mxu0 0.0
      %1139 = vmatpush1.msra.mxu0 0.0
      %1140 = vmatprep.subr.mxu0 0.0
      %1141 = vmatpush1.msra.mxu0 0.0
      %1142 = vmatprep.subr.mxu0 0.0
      %1143 = vmatpush1.msra.mxu0 0.0
      %1144 = vmatprep.subr.mxu0 0.0
      %1145 = vmatpush1.msra.mxu0 0.0
      %1146 = vmatprep.subr.mxu0 0.0
      %1147 = vmatpush1.msra.mxu0 0.0
      %1148 = vmatprep.subr.mxu0 0.0
      %1149 = vmatpush1.msra.mxu0 0.0
      %1150 = vmatprep.subr.mxu0 0.0
      %1151 = vmatpush1.msra.mxu0 0.0
      %1152 = vmatprep.subr.mxu0 0.0
      %1153 = vmatpush1.msra.mxu0 0.0
      %1154 = vmatprep.subr.mxu0 0.0
      %1155 = vmatpush1.msra.mxu0 0.0
      %1156 = vmatprep.subr.mxu0 0.0
      %1157 = vmatpush1.msra.mxu0 0.0
      %1158 = vmatprep.subr.mxu0 0.0
      %1159 = vmatpush1.msra.mxu0 0.0
      %1160 = vmatprep.subr.mxu0 0.0
      %1161 = vmatpush1.msra.mxu0 0.0
      %1162 = vmatprep.subr.mxu0 0.0
      %1163 = vmatpush1.msra.mxu0 0.0
      %1164 = vmatprep.subr.mxu0 0.0
      %1165 = vmatpush1.msra.mxu0 %v1132
      %1166 = vmatprep.subr.mxu0 0.0
      %1167 = vmatpush2.msra.mxu0 0.0
      %1168 = vmatprep.subr.mxu0 0.0
      %1169 = vmatpush2.msra.mxu0 0.0
      %1170 = vmatprep.subr.mxu0 0.0
      %1171 = vmatpush2.msra.mxu0 0.0
      %1172 = vmatprep.subr.mxu0 0.0
      %1173 = vmatpush2.msra.mxu0 0.0
      %1174 = vmatprep.subr.mxu0 0.0
      %1175 = vmatpush2.msra.mxu0 0.0
      %1176 = vmatprep.subr.mxu0 0.0
      %1177 = vmatpush2.msra.mxu0 0.0
      %1178 = vmatprep.subr.mxu0 0.0
      %1179 = vmatpush2.msra.mxu0 0.0
      %1180 = vmatprep.subr.mxu0 0.0
      %1181 = vmatpush2.msra.mxu0 0.0
      %1182 = vmatprep.subr.mxu0 0.0
      %1183 = vmatpush2.msra.mxu0 0.0
      %1184 = vmatprep.subr.mxu0 0.0
      %1185 = vmatpush2.msra.mxu0 0.0
      %1186 = vmatprep.subr.mxu0 0.0
      %1187 = vmatpush2.msra.mxu0 0.0
      %1188 = vmatprep.subr.mxu0 0.0
      %1189 = vmatpush2.msra.mxu0 0.0
      %1190 = vmatprep.subr.mxu0 0.0
      %1191 = vmatpush2.msra.mxu0 0.0
      %1192 = vmatprep.subr.mxu0 0.0
      %1193 = vmatpush2.msra.mxu0 0.0
      %1194 = vmatprep.subr.mxu0 0.0
      %1195 = vmatpush2.msra.mxu0 0.0
      %1196 = vmatprep.subr.mxu0 0.0
      %1197 = vmatpush2.msra.mxu0 0.0
      %1198 = vmatprep.mubr.f32.mxu0 0.0
      %1199 = vmatmul.mubr.f32.gmra.mxu0 %v1127
      %v1200 = vpop.f32.mrf.mxu0
      %v1201 = vadd.f32 0.0, %v1200
      %v1202 = vpop.f32.mrf.mxu0
      %1203 = vmatprep.mubr.f32.mxu0 0.0
      %1204 = vmatmul.mubr.f32.gmra.mxu0 %v1129
      %v1205 = vpop.f32.mrf.mxu0
      %v1206 = vadd.f32 0.0, %v1205
      %v1207 = vpop.f32.mrf.mxu0
      %1208 = vdwg.mxu0
      %v1209 = vadd.f32 %v1117, %v1201
      %v1210 = vadd.f32 %v1118, %v1206
      %s1211 = scalar_lea.vmem %s6, 4
      %v1212 = vld [vmem:[%s1211] sm:$0x3]
      %v1213 = vsel %vm1033, %v556, 0
      %v1215 = vsel %vm1033, %v557, 0
      %v1218 = vsel %vm748, %v1212, 0
      %1220 = vmatprep.subr.mxu0 0.0
      %1221 = vmatpush1.msra.mxu0 0.0
      %1222 = vmatprep.subr.mxu0 0.0
      %1223 = vmatpush1.msra.mxu0 0.0
      %1224 = vmatprep.subr.mxu0 0.0
      %1225 = vmatpush1.msra.mxu0 0.0
      %1226 = vmatprep.subr.mxu0 0.0
      %1227 = vmatpush1.msra.mxu0 0.0
      %1228 = vmatprep.subr.mxu0 0.0
      %1229 = vmatpush1.msra.mxu0 0.0
      %1230 = vmatprep.subr.mxu0 0.0
      %1231 = vmatpush1.msra.mxu0 0.0
      %1232 = vmatprep.subr.mxu0 0.0
      %1233 = vmatpush1.msra.mxu0 0.0
      %1234 = vmatprep.subr.mxu0 0.0
      %1235 = vmatpush1.msra.mxu0 0.0
      %1236 = vmatprep.subr.mxu0 0.0
      %1237 = vmatpush1.msra.mxu0 0.0
      %1238 = vmatprep.subr.mxu0 0.0
      %1239 = vmatpush1.msra.mxu0 0.0
      %1240 = vmatprep.subr.mxu0 0.0
      %1241 = vmatpush1.msra.mxu0 0.0
      %1242 = vmatprep.subr.mxu0 0.0
      %1243 = vmatpush1.msra.mxu0 0.0
      %1244 = vmatprep.subr.mxu0 0.0
      %1245 = vmatpush1.msra.mxu0 0.0
      %1246 = vmatprep.subr.mxu0 0.0
      %1247 = vmatpush1.msra.mxu0 0.0
      %1248 = vmatprep.subr.mxu0 0.0
      %1249 = vmatpush1.msra.mxu0 0.0
      %1250 = vmatprep.subr.mxu0 0.0
      %1251 = vmatpush1.msra.mxu0 %v1218
      %1252 = vmatprep.subr.mxu0 0.0
      %1253 = vmatpush2.msra.mxu0 0.0
      %1254 = vmatprep.subr.mxu0 0.0
      %1255 = vmatpush2.msra.mxu0 0.0
      %1256 = vmatprep.subr.mxu0 0.0
      %1257 = vmatpush2.msra.mxu0 0.0
      %1258 = vmatprep.subr.mxu0 0.0
      %1259 = vmatpush2.msra.mxu0 0.0
      %1260 = vmatprep.subr.mxu0 0.0
      %1261 = vmatpush2.msra.mxu0 0.0
      %1262 = vmatprep.subr.mxu0 0.0
      %1263 = vmatpush2.msra.mxu0 0.0
      %1264 = vmatprep.subr.mxu0 0.0
      %1265 = vmatpush2.msra.mxu0 0.0
      %1266 = vmatprep.subr.mxu0 0.0
      %1267 = vmatpush2.msra.mxu0 0.0
      %1268 = vmatprep.subr.mxu0 0.0
      %1269 = vmatpush2.msra.mxu0 0.0
      %1270 = vmatprep.subr.mxu0 0.0
      %1271 = vmatpush2.msra.mxu0 0.0
      %1272 = vmatprep.subr.mxu0 0.0
      %1273 = vmatpush2.msra.mxu0 0.0
      %1274 = vmatprep.subr.mxu0 0.0
      %1275 = vmatpush2.msra.mxu0 0.0
      %1276 = vmatprep.subr.mxu0 0.0
      %1277 = vmatpush2.msra.mxu0 0.0
      %1278 = vmatprep.subr.mxu0 0.0
      %1279 = vmatpush2.msra.mxu0 0.0
      %1280 = vmatprep.subr.mxu0 0.0
      %1281 = vmatpush2.msra.mxu0 0.0
      %1282 = vmatprep.subr.mxu0 0.0
      %1283 = vmatpush2.msra.mxu0 0.0
      %1284 = vmatprep.mubr.f32.mxu0 0.0
      %1285 = vmatmul.mubr.f32.gmra.mxu0 %v1213
      %v1286 = vpop.f32.mrf.mxu0
      %v1287 = vadd.f32 0.0, %v1286
      %v1288 = vpop.f32.mrf.mxu0
      %1289 = vmatprep.mubr.f32.mxu0 0.0
      %1290 = vmatmul.mubr.f32.gmra.mxu0 %v1215
      %v1291 = vpop.f32.mrf.mxu0
      %v1292 = vadd.f32 0.0, %v1291
      %v1293 = vpop.f32.mrf.mxu0
      %1294 = vdwg.mxu0
      %v1295 = vadd.f32 %v1209, %v1287
      %v1296 = vadd.f32 %v1210, %v1292
      // Predicated region
      $region81: #{up_causal2_pallas.1} parent=75 // pred_check
        %p1297 = pneg %p510
      $region82: #{up_causal2_pallas.1} parent=75 // pred_check_branch
        %1299 = sbr.rel (%p1297) target = $region84
      $region83: #{up_causal2_pallas.1} parent=75 // pred_region
        %v1300 = vld [vmem:[#allocation2] sm:$0x1]
        %vm1301 = vcmask 64512
        %v1302 = vsel %vm1301, %v1295, 0.0
        %v1303 = vsel %vm1301, %v1296, 0.0
        %v1304 = vadd.f32 %v1302, %v1303
        %v1305 = vrot.slane %v1304, 4
        %v1306 = vadd.f32 %v1304, %v1305
        %v1307 = vrot.slane %v1306, 2
        %v1308 = vadd.f32 %v1306, %v1307
        %v1309 = vrot.slane %v1308, 1
        %v1310 = vadd.f32 %v1308, %v1309
        %v1311 = vadd.f32 %v1300, %v1310
        %vm1312 = vcmask 57344
        %1313 = vst.msk [vmem:[#allocation2] sm:$0x1] %vm1312, %v1311
        %v1314 = vld [vmem:[#allocation2 + $0x1] sm:$0x1]
        %v1315 = vmul.f32 %v1295, %v1295
        %v1316 = vmul.f32 %v1296, %v1296
        %v1317 = vsel %vm1301, %v1315, 0.0
        %v1318 = vsel %vm1301, %v1316, 0.0
        %v1319 = vadd.f32 %v1317, %v1318
        %v1320 = vrot.slane %v1319, 4
        %v1321 = vadd.f32 %v1319, %v1320
        %v1322 = vrot.slane %v1321, 2
        %v1323 = vadd.f32 %v1321, %v1322
        %v1324 = vrot.slane %v1323, 1
        %v1325 = vadd.f32 %v1323, %v1324
        %v1326 = vadd.f32 %v1314, %v1325
        %1327 = vst.msk [vmem:[#allocation2 + $0x1] sm:$0x1] %vm1312, %v1326
      $region84: #{up_causal2_pallas.1} parent=75 // pred_fallthru
        _
      %p1328 = scmp.ge.s32.totalorder %s29, 1
      // Predicated region
      $region85: #{up_causal2_pallas.1} parent=75 // pred_check
        %p1329 = pneg %p1328
      $region86: #{up_causal2_pallas.1} parent=75 // pred_check_branch
        %1331 = sbr.rel (%p1329) target = $region88
      $region87: #{up_causal2_pallas.1} parent=75 // pred_region
        %v1332 = vld [vmem:[#allocation2] sm:$0x1]
        %v1333 = vmul.f32 %v1332, 0.03125
        %v1334 = vld [vmem:[#allocation2 + $0x1] sm:$0x1]
        %v1335 = vmul.f32 %v1334, 0.03125
        %v1336 = vmul.f32 %v1333, %v1333
        %v1337 = vsub.f32 %v1335, %v1336
        %v1338 = vld [vmem:[%s8] sm:$0x1]
        %v1339 = vadd.f32 %v1337, 1e-05
        %v1340 = vrsqrt.pop %v1339
        %v1341 = vmul.f32 %v1338, %v1340
        %v1343 = vlaneseq
        %v1344 = vshrl.u32 %v1343, 7
        %v1345 = vsub.s32 0, %v1344
        %v1346 = vrot.slane %v1341, %v1345
        %v1348 = vmul.f32 %v1295, %v1346
        %v1349 = vmul.f32 %v1296, %v1346
        %v1350 = vld [vmem:[%s9] sm:$0x1]
        %v1351 = vmul.f32 %v1333, %v1341
        %v1352 = vsub.f32 %v1350, %v1351
        %v1354 = vlaneseq
        %v1355 = vshrl.u32 %v1354, 7
        %v1356 = vsub.s32 0, %v1355
        %v1357 = vrot.slane %v1352, %v1356
        %v1359 = vadd.f32 %v1348, %v1357
        %v1360 = vadd.f32 %v1349, %v1357
        %v1361 = vmax.f32 %v1359, 0.0
        %v1362 = vmax.f32 %v1360, 0.0
        %v1363 = vld [vmem:[%s11] sm:$0x1]
        %v1366 = vrot.slane %v1361, 6
        %v1367 = vrot.slane %v1362, 6
        %v1368 = vsel %vm748, %v1366, %v1367
        %v1370 = vsel %vm748, 0.0, %v1366
        %v1371 = vld [vmem:[%s10] sm:$0xff]
        %vm1372 = vcmask 64512
        %v1374 = vsel %vm1372, %v1370, 0
        %v1376 = vsel %vm1372, %v1368, 0
        %1378 = vmatprep.subr.mxu0 0.0
        %1379 = vmatpush1.msra.mxu0 0.0
        %1380 = vmatprep.subr.mxu0 0.0
        %1381 = vmatpush1.msra.mxu0 0.0
        %1382 = vmatprep.subr.mxu0 0.0
        %1383 = vmatpush1.msra.mxu0 0.0
        %1384 = vmatprep.subr.mxu0 0.0
        %1385 = vmatpush1.msra.mxu0 0.0
        %1386 = vmatprep.subr.mxu0 0.0
        %1387 = vmatpush1.msra.mxu0 0.0
        %1388 = vmatprep.subr.mxu0 0.0
        %1389 = vmatpush1.msra.mxu0 0.0
        %1390 = vmatprep.subr.mxu0 0.0
        %1391 = vmatpush1.msra.mxu0 0.0
        %1392 = vmatprep.subr.mxu0 0.0
        %1393 = vmatpush1.msra.mxu0 0.0
        %1394 = vmatprep.subr.mxu0 0.0
        %1395 = vmatpush1.msra.mxu0 0.0
        %1396 = vmatprep.subr.mxu0 0.0
        %1397 = vmatpush1.msra.mxu0 0.0
        %1398 = vmatprep.subr.mxu0 0.0
        %1399 = vmatpush1.msra.mxu0 0.0
        %1400 = vmatprep.subr.mxu0 0.0
        %1401 = vmatpush1.msra.mxu0 0.0
        %1402 = vmatprep.subr.mxu0 0.0
        %1403 = vmatpush1.msra.mxu0 0.0
        %1404 = vmatprep.subr.mxu0 0.0
        %1405 = vmatpush1.msra.mxu0 0.0
        %1406 = vmatprep.subr.mxu0 0.0
        %1407 = vmatpush1.msra.mxu0 0.0
        %1408 = vmatprep.subr.mxu0 0.0
        %1409 = vmatpush1.msra.mxu0 %v1371
        %1410 = vmatprep.subr.mxu0 0.0
        %1411 = vmatpush2.msra.mxu0 0.0
        %1412 = vmatprep.subr.mxu0 0.0
        %1413 = vmatpush2.msra.mxu0 0.0
        %1414 = vmatprep.subr.mxu0 0.0
        %1415 = vmatpush2.msra.mxu0 0.0
        %1416 = vmatprep.subr.mxu0 0.0
        %1417 = vmatpush2.msra.mxu0 0.0
        %1418 = vmatprep.subr.mxu0 0.0
        %1419 = vmatpush2.msra.mxu0 0.0
        %1420 = vmatprep.subr.mxu0 0.0
        %1421 = vmatpush2.msra.mxu0 0.0
        %1422 = vmatprep.subr.mxu0 0.0
        %1423 = vmatpush2.msra.mxu0 0.0
        %1424 = vmatprep.subr.mxu0 0.0
        %1425 = vmatpush2.msra.mxu0 0.0
        %1426 = vmatprep.subr.mxu0 0.0
        %1427 = vmatpush2.msra.mxu0 0.0
        %1428 = vmatprep.subr.mxu0 0.0
        %1429 = vmatpush2.msra.mxu0 0.0
        %1430 = vmatprep.subr.mxu0 0.0
        %1431 = vmatpush2.msra.mxu0 0.0
        %1432 = vmatprep.subr.mxu0 0.0
        %1433 = vmatpush2.msra.mxu0 0.0
        %1434 = vmatprep.subr.mxu0 0.0
        %1435 = vmatpush2.msra.mxu0 0.0
        %1436 = vmatprep.subr.mxu0 0.0
        %1437 = vmatpush2.msra.mxu0 0.0
        %1438 = vmatprep.subr.mxu0 0.0
        %1439 = vmatpush2.msra.mxu0 0.0
        %1440 = vmatprep.subr.mxu0 0.0
        %1441 = vmatpush2.msra.mxu0 0.0
        %1442 = vmatprep.mubr.f32.mxu0 0.0
        %1443 = vmatmul.mubr.f32.gmra.mxu0 %v1374
        %v1444 = vpop.f32.mrf.mxu0
        %v1445 = vadd.f32 0.0, %v1444
        %v1446 = vpop.f32.mrf.mxu0
        %1447 = vmatprep.mubr.f32.mxu0 0.0
        %1448 = vmatmul.mubr.f32.gmra.mxu0 %v1376
        %v1449 = vpop.f32.mrf.mxu0
        %v1450 = vadd.f32 0.0, %v1449
        %v1451 = vpop.f32.mrf.mxu0
        %1452 = vdwg.mxu0
        %v1454 = vlaneseq
        %v1455 = vshrl.u32 %v1454, 7
        %v1456 = vsub.s32 0, %v1455
        %v1457 = vrot.slane %v1363, %v1456
        %v1459 = vadd.f32 %v1457, %v1445
        %v1460 = vadd.f32 %v1457, %v1450
        %v1461 = vrot.slane %v1361, 7
        %v1462 = vrot.slane %v1362, 7
        %v1463 = vsel %vm846, %v1461, %v1462
        %v1465 = vsel %vm846, 0.0, %v1461
        %s1466 = scalar_lea.vmem %s10, 8
        %v1467 = vld [vmem:[%s1466] sm:$0xff]
        %v1469 = vsel %vm1372, %v1465, 0
        %v1471 = vsel %vm1372, %v1463, 0
        %1473 = vmatprep.subr.mxu0 0.0
        %1474 = vmatpush1.msra.mxu0 0.0
        %1475 = vmatprep.subr.mxu0 0.0
        %1476 = vmatpush1.msra.mxu0 0.0
        %1477 = vmatprep.subr.mxu0 0.0
        %1478 = vmatpush1.msra.mxu0 0.0
        %1479 = vmatprep.subr.mxu0 0.0
        %1480 = vmatpush1.msra.mxu0 0.0
        %1481 = vmatprep.subr.mxu0 0.0
        %1482 = vmatpush1.msra.mxu0 0.0
        %1483 = vmatprep.subr.mxu0 0.0
        %1484 = vmatpush1.msra.mxu0 0.0
        %1485 = vmatprep.subr.mxu0 0.0
        %1486 = vmatpush1.msra.mxu0 0.0
        %1487 = vmatprep.subr.mxu0 0.0
        %1488 = vmatpush1.msra.mxu0 0.0
        %1489 = vmatprep.subr.mxu0 0.0
        %1490 = vmatpush1.msra.mxu0 0.0
        %1491 = vmatprep.subr.mxu0 0.0
        %1492 = vmatpush1.msra.mxu0 0.0
        %1493 = vmatprep.subr.mxu0 0.0
        %1494 = vmatpush1.msra.mxu0 0.0
        %1495 = vmatprep.subr.mxu0 0.0
        %1496 = vmatpush1.msra.mxu0 0.0
        %1497 = vmatprep.subr.mxu0 0.0
        %1498 = vmatpush1.msra.mxu0 0.0
        %1499 = vmatprep.subr.mxu0 0.0
        %1500 = vmatpush1.msra.mxu0 0.0
        %1501 = vmatprep.subr.mxu0 0.0
        %1502 = vmatpush1.msra.mxu0 0.0
        %1503 = vmatprep.subr.mxu0 0.0
        %1504 = vmatpush1.msra.mxu0 %v1467
        %1505 = vmatprep.subr.mxu0 0.0
        %1506 = vmatpush2.msra.mxu0 0.0
        %1507 = vmatprep.subr.mxu0 0.0
        %1508 = vmatpush2.msra.mxu0 0.0
        %1509 = vmatprep.subr.mxu0 0.0
        %1510 = vmatpush2.msra.mxu0 0.0
        %1511 = vmatprep.subr.mxu0 0.0
        %1512 = vmatpush2.msra.mxu0 0.0
        %1513 = vmatprep.subr.mxu0 0.0
        %1514 = vmatpush2.msra.mxu0 0.0
        %1515 = vmatprep.subr.mxu0 0.0
        %1516 = vmatpush2.msra.mxu0 0.0
        %1517 = vmatprep.subr.mxu0 0.0
        %1518 = vmatpush2.msra.mxu0 0.0
        %1519 = vmatprep.subr.mxu0 0.0
        %1520 = vmatpush2.msra.mxu0 0.0
        %1521 = vmatprep.subr.mxu0 0.0
        %1522 = vmatpush2.msra.mxu0 0.0
        %1523 = vmatprep.subr.mxu0 0.0
        %1524 = vmatpush2.msra.mxu0 0.0
        %1525 = vmatprep.subr.mxu0 0.0
        %1526 = vmatpush2.msra.mxu0 0.0
        %1527 = vmatprep.subr.mxu0 0.0
        %1528 = vmatpush2.msra.mxu0 0.0
        %1529 = vmatprep.subr.mxu0 0.0
        %1530 = vmatpush2.msra.mxu0 0.0
        %1531 = vmatprep.subr.mxu0 0.0
        %1532 = vmatpush2.msra.mxu0 0.0
        %1533 = vmatprep.subr.mxu0 0.0
        %1534 = vmatpush2.msra.mxu0 0.0
        %1535 = vmatprep.subr.mxu0 0.0
        %1536 = vmatpush2.msra.mxu0 0.0
        %1537 = vmatprep.mubr.f32.mxu0 0.0
        %1538 = vmatmul.mubr.f32.gmra.mxu0 %v1469
        %v1539 = vpop.f32.mrf.mxu0
        %v1540 = vadd.f32 0.0, %v1539
        %v1541 = vpop.f32.mrf.mxu0
        %1542 = vmatprep.mubr.f32.mxu0 0.0
        %1543 = vmatmul.mubr.f32.gmra.mxu0 %v1471
        %v1544 = vpop.f32.mrf.mxu0
        %v1545 = vadd.f32 0.0, %v1544
        %v1546 = vpop.f32.mrf.mxu0
        %1547 = vdwg.mxu0
        %v1548 = vadd.f32 %v1459, %v1540
        %v1549 = vadd.f32 %v1460, %v1545
        %s1550 = scalar_lea.vmem %s10, 16
        %v1551 = vld [vmem:[%s1550] sm:$0xff]
        %v1552 = vsel %vm1372, %v1361, 0
        %v1554 = vsel %vm1372, %v1362, 0
        %1556 = vmatprep.subr.mxu0 0.0
        %1557 = vmatpush1.msra.mxu0 0.0
        %1558 = vmatprep.subr.mxu0 0.0
        %1559 = vmatpush1.msra.mxu0 0.0
        %1560 = vmatprep.subr.mxu0 0.0
        %1561 = vmatpush1.msra.mxu0 0.0
        %1562 = vmatprep.subr.mxu0 0.0
        %1563 = vmatpush1.msra.mxu0 0.0
        %1564 = vmatprep.subr.mxu0 0.0
        %1565 = vmatpush1.msra.mxu0 0.0
        %1566 = vmatprep.subr.mxu0 0.0
        %1567 = vmatpush1.msra.mxu0 0.0
        %1568 = vmatprep.subr.mxu0 0.0
        %1569 = vmatpush1.msra.mxu0 0.0
        %1570 = vmatprep.subr.mxu0 0.0
        %1571 = vmatpush1.msra.mxu0 0.0
        %1572 = vmatprep.subr.mxu0 0.0
        %1573 = vmatpush1.msra.mxu0 0.0
        %1574 = vmatprep.subr.mxu0 0.0
        %1575 = vmatpush1.msra.mxu0 0.0
        %1576 = vmatprep.subr.mxu0 0.0
        %1577 = vmatpush1.msra.mxu0 0.0
        %1578 = vmatprep.subr.mxu0 0.0
        %1579 = vmatpush1.msra.mxu0 0.0
        %1580 = vmatprep.subr.mxu0 0.0
        %1581 = vmatpush1.msra.mxu0 0.0
        %1582 = vmatprep.subr.mxu0 0.0
        %1583 = vmatpush1.msra.mxu0 0.0
        %1584 = vmatprep.subr.mxu0 0.0
        %1585 = vmatpush1.msra.mxu0 0.0
        %1586 = vmatprep.subr.mxu0 0.0
        %1587 = vmatpush1.msra.mxu0 %v1551
        %1588 = vmatprep.subr.mxu0 0.0
        %1589 = vmatpush2.msra.mxu0 0.0
        %1590 = vmatprep.subr.mxu0 0.0
        %1591 = vmatpush2.msra.mxu0 0.0
        %1592 = vmatprep.subr.mxu0 0.0
        %1593 = vmatpush2.msra.mxu0 0.0
        %1594 = vmatprep.subr.mxu0 0.0
        %1595 = vmatpush2.msra.mxu0 0.0
        %1596 = vmatprep.subr.mxu0 0.0
        %1597 = vmatpush2.msra.mxu0 0.0
        %1598 = vmatprep.subr.mxu0 0.0
        %1599 = vmatpush2.msra.mxu0 0.0
        %1600 = vmatprep.subr.mxu0 0.0
        %1601 = vmatpush2.msra.mxu0 0.0
        %1602 = vmatprep.subr.mxu0 0.0
        %1603 = vmatpush2.msra.mxu0 0.0
        %1604 = vmatprep.subr.mxu0 0.0
        %1605 = vmatpush2.msra.mxu0 0.0
        %1606 = vmatprep.subr.mxu0 0.0
        %1607 = vmatpush2.msra.mxu0 0.0
        %1608 = vmatprep.subr.mxu0 0.0
        %1609 = vmatpush2.msra.mxu0 0.0
        %1610 = vmatprep.subr.mxu0 0.0
        %1611 = vmatpush2.msra.mxu0 0.0
        %1612 = vmatprep.subr.mxu0 0.0
        %1613 = vmatpush2.msra.mxu0 0.0
        %1614 = vmatprep.subr.mxu0 0.0
        %1615 = vmatpush2.msra.mxu0 0.0
        %1616 = vmatprep.subr.mxu0 0.0
        %1617 = vmatpush2.msra.mxu0 0.0
        %1618 = vmatprep.subr.mxu0 0.0
        %1619 = vmatpush2.msra.mxu0 0.0
        %1620 = vmatprep.mubr.f32.mxu0 0.0
        %1621 = vmatmul.mubr.f32.gmra.mxu0 %v1552
        %v1622 = vpop.f32.mrf.mxu0
        %v1623 = vadd.f32 0.0, %v1622
        %v1624 = vpop.f32.mrf.mxu0
        %1625 = vmatprep.mubr.f32.mxu0 0.0
        %1626 = vmatmul.mubr.f32.gmra.mxu0 %v1554
        %v1627 = vpop.f32.mrf.mxu0
        %v1628 = vadd.f32 0.0, %v1627
        %v1629 = vpop.f32.mrf.mxu0
        %1630 = vdwg.mxu0
        %v1631 = vadd.f32 %v1548, %v1623
        %v1632 = vadd.f32 %v1549, %v1628
        %p1633 = scmp.eq.s32.totalorder %s29, 1
        // Predicated region
        $region89: #{up_causal2_pallas.1} parent=87 // pred_check
          %p1634 = pneg %p1633
        $region90: #{up_causal2_pallas.1} parent=87 // pred_check_branch
          %1636 = sbr.rel (%p1634) target = $region92
        $region91: #{up_causal2_pallas.1} parent=87 // pred_region
          %v1637 = vld [vmem:[#allocation3] sm:$0x1]
          %v1638 = vsel %vm1372, %v1631, 0.0
          %v1639 = vsel %vm1372, %v1632, 0.0
          %v1640 = vadd.f32 %v1638, %v1639
          %v1641 = vrot.slane %v1640, 4
          %v1642 = vadd.f32 %v1640, %v1641
          %v1643 = vrot.slane %v1642, 2
          %v1644 = vadd.f32 %v1642, %v1643
          %v1645 = vrot.slane %v1644, 1
          %v1646 = vadd.f32 %v1644, %v1645
          %v1647 = vadd.f32 %v1637, %v1646
          %vm1648 = vcmask 57344
          %1649 = vst.msk [vmem:[#allocation3] sm:$0x1] %vm1648, %v1647
          %v1650 = vld [vmem:[#allocation3 + $0x1] sm:$0x1]
          %v1651 = vmul.f32 %v1631, %v1631
          %v1652 = vmul.f32 %v1632, %v1632
          %v1653 = vsel %vm1372, %v1651, 0.0
          %v1654 = vsel %vm1372, %v1652, 0.0
          %v1655 = vadd.f32 %v1653, %v1654
          %v1656 = vrot.slane %v1655, 4
          %v1657 = vadd.f32 %v1655, %v1656
          %v1658 = vrot.slane %v1657, 2
          %v1659 = vadd.f32 %v1657, %v1658
          %v1660 = vrot.slane %v1659, 1
          %v1661 = vadd.f32 %v1659, %v1660
          %v1662 = vadd.f32 %v1650, %v1661
          %1663 = vst.msk [vmem:[#allocation3 + $0x1] sm:$0x1] %vm1648, %v1662
        $region92: #{up_causal2_pallas.1} parent=87 // pred_fallthru
          _
        %p1664 = scmp.eq.s32.totalorder %s29, 2
        // Predicated region
        $region93: #{up_causal2_pallas.1} parent=87 // pred_check
          %p1665 = pneg %p1664
        $region94: #{up_causal2_pallas.1} parent=87 // pred_check_branch
          %1667 = sbr.rel (%p1665) target = $region96
        $region95: #{up_causal2_pallas.1} parent=87 // pred_region
          %v1668 = vld [vmem:[#allocation3] sm:$0x1]
          %v1669 = vmul.f32 %v1668, 0.03125
          %v1670 = vld [vmem:[#allocation3 + $0x1] sm:$0x1]
          %v1671 = vmul.f32 %v1670, 0.03125
          %v1672 = vmul.f32 %v1669, %v1669
          %v1673 = vsub.f32 %v1671, %v1672
          %v1674 = vld [vmem:[%s12] sm:$0x1]
          %v1675 = vadd.f32 %v1673, 1e-05
          %v1676 = vrsqrt.pop %v1675
          %v1677 = vmul.f32 %v1674, %v1676
          %v1679 = vlaneseq
          %v1680 = vshrl.u32 %v1679, 7
          %v1681 = vsub.s32 0, %v1680
          %v1682 = vrot.slane %v1677, %v1681
          %v1684 = vmul.f32 %v1631, %v1682
          %v1685 = vmul.f32 %v1632, %v1682
          %v1686 = vld [vmem:[%s13] sm:$0x1]
          %v1687 = vmul.f32 %v1669, %v1677
          %v1688 = vsub.f32 %v1686, %v1687
          %v1690 = vlaneseq
          %v1691 = vshrl.u32 %v1690, 7
          %v1692 = vsub.s32 0, %v1691
          %v1693 = vrot.slane %v1688, %v1692
          %v1695 = vadd.f32 %v1684, %v1693
          %v1696 = vadd.f32 %v1685, %v1693
          %v1697 = vmax.f32 %v1695, 0.0
          %v1698 = vmax.f32 %v1696, 0.0
          %1699 = vst.msk [vmem:[%s507] sm:$0xff] %vm1372, %v1697
          %1700 = vst.msk [vmem:[%s507 + $0x8] sm:$0xff] %vm1372, %v1698
        $region96: #{up_causal2_pallas.1} parent=87 // pred_fallthru
          _
      $region88: #{up_causal2_pallas.1} parent=75 // pred_fallthru
        _
      %p1701 = scmp.eq.s32.totalorder %s29, 2
      %s1702 = scalar_select %p1701, %s30, 0
      %p1703 = scmp.lt.s32.totalorder %s1702, 1
      %s1704 = scalar_select %p1703, %s1702, 1
      %s1705 = smul.addr %s1704, 2
      %s1706 = smul.addr %s1705, 8
      %s1707 = scalar_lea.vmem %s14, %s1706
      // Predicated region
      $region97: #{up_causal2_pallas.1} parent=75 // pred_check
        %p1708 = pneg %p363
      $region98: #{up_causal2_pallas.1} parent=75 // pred_check_branch
        %1710 = sbr.rel (%p1708) target = $region100
      $region99: #{up_causal2_pallas.1} parent=75 // pred_region
        %p1711 = scmp.eq.s32.totalorder %s29, 2
        %s1712 = scalar_select %p1711, %s30, 0
      $region100: #{up_causal2_pallas.1} parent=75 // pred_fallthru
        _
    $region76: #{up_causal2_pallas.1} parent=5 // pred_fallthru
      _
    %p1713 = scmp.le.s32.totalorder 2, %s20
    // Predicated region
    $region101: #{up_causal2_pallas.1} parent=5 // pred_check
      %p1714 = pneg %p1713
    $region102: #{up_causal2_pallas.1} parent=5 // pred_check_branch
      %1716 = sbr.rel (%p1714) target = $region104
    $region103: #{up_causal2_pallas.1} parent=5 // pred_region
      %s1717 = ssub.s32 %s20, 2
      // Predicated region
      $region105: #{up_causal2_pallas.1} parent=103 // pred_check
        %p1718 = pneg %p369
      $region106: #{up_causal2_pallas.1} parent=103 // pred_check_branch
        %1720 = sbr.rel (%p1718) target = $region108
      $region107: #{up_causal2_pallas.1} parent=103 // pred_region
        %p1721 = scmp.eq.s32.totalorder %s31, 2
        %s1722 = scalar_select %p1721, %s32, 0
        %p1723 = scmp.lt.s32.totalorder %s1722, 1
        %s1724 = scalar_select %p1723, %s1722, 1
        %s1725 = smul.addr %s1724, 2
        %s1726 = smul.addr %s1725, 8
        %s1727 = scalar_lea.vmem %s14, %s1726
      $region108: #{up_causal2_pallas.1} parent=103 // pred_fallthru
        _
    $region104: #{up_causal2_pallas.1} parent=5 // pred_fallthru
      _
  $region6: #{up_causal2_pallas.1} parent=0 // loop_footer
    %s24 = sadd.s32 1, %s20
  $region7: #{up_causal2_pallas.1} parent=0 // loop_footer_branch
    %19 = sbr.rel target = $region3
  $region8: #{up_causal2_pallas.1} parent=0 // loop_exit
    _

</llo_original>
